<compile_context>
chip_gen: v7x
topology: tpu7x:2x2x1
jax: 0.10.0
libtpu: 0.0.40
codegen_flags: <defaults>
</compile_context>

<pallas_src>
import functools

import jax
import jax.numpy as jnp
from jax.experimental import pallas as pl
from jax.experimental.pallas import tpu as pltpu

NEG_SLOPE = 0.01  # nn.LeakyReLU default


# ------------------------------- kernel --------------------------------------
def m3tn2_kernel(
    # per-batch-tile input: [x | t]
    xt_ref,
    # packed / resident weights (matmul weights bf16, biases f32)
    w_first_ref, b_first_ref,                       # [gating fc1 | expert fc1's] (+ zero t-row)
    wg2_ref, bg2_ref, wg3_ref, bg3_ref, wg4_ref, bg4_ref,
    we2_bd_ref, be2_ref,                            # block-diagonal expert fc2
    ones_bd_ref, rep_ref,                           # segment-sum / gate-repeat patterns
    w1rf_ref, w1t_ref, b1_ref,                      # s_fc1: (fold @ w1r) / t-column / bias
    w2_ref, b2_ref, w3_ref, b3_ref, w4_ref, b4_ref, wl_ref, bl_ref,
    # packed output: [:, 0] = s_logit, [:, 1] = y1 - y0
    out_ref,
    *, in_dim, gate_hidden,
):
    mdt = w_first_ref.dtype                         # matmul input dtype (bf16)
    dot = functools.partial(jnp.dot, preferred_element_type=jnp.float32)

    xt = xt_ref[...]                                # [B, in_dim+1] f32, last column = t
    t = xt[:, in_dim:in_dim + 1]                    # [B, 1]
    B = xt.shape[0]

    # ---- fused first layer: gating fc1 + all expert fc1 (both ReLU) ---------
    # w_first has an extra all-zero row, so [x | t] can be used directly.
    h_all = jnp.maximum(dot(xt.astype(mdt), w_first_ref[...]) + b_first_ref[...], 0.0)
    hg = h_all[:, :gate_hidden]                     # [B, 128]  gating branch
    he = h_all[:, gate_hidden:]                     # [B, E*h]  expert branch

    # ---- gating tail (Dropout == identity at inference) ---------------------
    h = dot(hg.astype(mdt), wg2_ref[...]) + bg2_ref[...]
    h = jnp.maximum(h, NEG_SLOPE * h)               # LeakyReLU
    h = dot(h.astype(mdt), wg3_ref[...]) + bg3_ref[...]
    h = jnp.maximum(h, NEG_SLOPE * h)               # LeakyReLU
    g = dot(h.astype(mdt), wg4_ref[...]) + bg4_ref[...]
    g = jnp.exp(g - jnp.max(g, axis=-1, keepdims=True))
    gate = g / jnp.sum(g, axis=-1, keepdims=True)   # exact divide: gate sums to 1

    # ---- expert second layer + vectorized per-expert softmax / combine ------
    o_all = dot(he.astype(mdt), we2_bd_ref[...]) + be2_ref[...]     # [B, E*out]
    # single per-row max is a valid stabilizer for every segment's softmax
    p = jnp.exp(o_all - jnp.max(o_all, axis=-1, keepdims=True))
    seg_sum = dot(p.astype(mdt), ones_bd_ref[...])                  # per-segment sums (broadcast)
    gate_rep = dot(gate.astype(mdt), rep_ref[...])                  # gate replicated per segment
    weighted = p * gate_rep * pl.reciprocal(seg_sum, approx=True)   # [B, E*out]

    # ---- shared head: expert-fold is pre-multiplied into w1rf ---------------
    c = dot(weighted.astype(mdt), w1rf_ref[...]) + b1_ref[...]      # shared part of s_fc1
    w1t = w1t_ref[...]                                              # [1, h] (f32)
    h1 = jnp.concatenate(
        [jnp.maximum(c + t * w1t, 0.0),             # treated branch
         jnp.maximum(c + (1.0 - t) * w1t, 0.0)],    # counterfactual branch
        axis=0)                                     # [2B, h]
    h2 = jnp.maximum(dot(h1.astype(mdt), w2_ref[...]) + b2_ref[...], 0.0)
    h3 = jnp.maximum(dot(h2.astype(mdt), w3_ref[...]) + b3_ref[...], 0.0)
    h4 = jnp.maximum(dot(h3.astype(mdt), w4_ref[...]) + b4_ref[...], 0.0)
    logits = dot(h4.astype(mdt), wl_ref[...]) + bl_ref[...]         # [2B, 1]

    s_logit = logits[:B]
    s_prob = jax.nn.sigmoid(s_logit)
    _s_prob = jax.nn.sigmoid(logits[B:])
    y0 = t * _s_prob + (1.0 - t) * s_prob
    y1 = t * s_prob + (1.0 - t) * _s_prob

    out_ref[...] = jnp.concatenate([s_logit, y1 - y0], axis=1)      # [B, 2]


# ------------------------------- wrapper --------------------------------------
def _round_up(n, m):
    return ((n + m - 1) // m) * m


def _tiling(B, target_tile=512):
    """Big tiles (amortize MXU weight pushes / per-step overhead), but cap the tile so
    the grid always has >= 2 steps (v7x has 2 TensorCores sharding the parallel axis).
    The batch is zero-padded so every step is a full, aligned tile."""
    tile = min(target_tile, max(8, _round_up((B + 1) // 2, 8)))
    steps = max(2, _round_up(B, tile) // tile)
    return tile, tile * steps


def m3tn2_forward(x, is_treat, p, *, target_tile=512):
    B, in_dim = x.shape
    gate_hidden = p["wg2"].shape[0]

    # fold t into x -> one activation DMA per grid step
    t = is_treat.reshape(B, 1).astype(jnp.float32)
    xt = jnp.concatenate([x.astype(jnp.float32), t], axis=1)       # [B, in_dim+1]

    tile, b_pad = _tiling(B, target_tile)
    if b_pad != B:
        xt = jnp.pad(xt, ((0, b_pad - B), (0, 0)))                 # zero rows = cheap dead work
    grid = (b_pad // tile,)

    def w_spec(w):
        # constant index map -> weight block stays resident across batch tiles
        return pl.BlockSpec(w.shape, lambda i: (0, 0))

    weights = (
        p["w_first"], p["b_first"],
        p["wg2"], p["bg2"], p["wg3"], p["bg3"], p["wg4"], p["bg4"],
        p["we2_bd"], p["be2_flat"],
        p["ones_bd"], p["rep_pat"],
        p["w1rf"], p["w1t"], p["b1"],
        p["w2"], p["b2"], p["w3"], p["b3"], p["w4"], p["b4"], p["wl"], p["bl"],
    )

    out = pl.pallas_call(
        functools.partial(m3tn2_kernel, in_dim=in_dim, gate_hidden=gate_hidden),
        grid=grid,
        out_shape=jax.ShapeDtypeStruct((b_pad, 2), jnp.float32),
        in_specs=[pl.BlockSpec((tile, in_dim + 1), lambda i: (i, 0))]
                 + [w_spec(w) for w in weights],
        out_specs=pl.BlockSpec((tile, 2), lambda i: (i, 0)),
        compiler_params=pltpu.CompilerParams(
            dimension_semantics=("parallel",),
            vmem_limit_bytes=32 * 1024 * 1024),
    )(xt, *weights)

    out = out[:B]
    return out[:, 0:1], out[:, 1:2]


# --------------------------- parameter construction --------------------------
def _init_linear(key, fan_in, fan_out):
    k1, k2 = jax.random.split(key)
    bound = 1.0 / float(fan_in) ** 0.5
    w = jax.random.uniform(k1, (fan_in, fan_out), jnp.float32, -bound, bound)
    b = jax.random.uniform(k2, (1, fan_out), jnp.float32, -bound, bound)
    return w, b


def make_params(key, input_dim, h_dim, output_dim, num_experts):
    keys = jax.random.split(key, 16)
    p = {}
    # gating: in->128->256->128->E
    p["wg1"], p["bg1"] = _init_linear(keys[0], input_dim, 128)
    p["wg2"], p["bg2"] = _init_linear(keys[1], 128, 256)
    p["wg3"], p["bg3"] = _init_linear(keys[2], 256, 128)
    p["wg4"], p["bg4"] = _init_linear(keys[3], 128, num_experts)
    # experts (stacked)
    we1, be1, we2, be2 = [], [], [], []
    ekeys = jax.random.split(keys[4], num_experts)
    for e in range(num_experts):
        k1, k2 = jax.random.split(ekeys[e])
        w1, b1 = _init_linear(k1, input_dim, h_dim)
        w2, b2 = _init_linear(k2, h_dim, output_dim)
        we1.append(w1); be1.append(b1); we2.append(w2); be2.append(b2)
    p["we1"] = jnp.stack(we1)                      # [E, in, h]
    p["be1"] = jnp.stack(be1)                      # [E, 1, h]
    p["we2"] = jnp.stack(we2)                      # [E, h, out]
    p["be2"] = jnp.stack(be2)                      # [E, 1, out]
    # shared head; s_fc1 takes cat(R, t) of width output_dim+1 -> split weight
    w1_full, p["b1"] = _init_linear(keys[5], output_dim + 1, h_dim)
    p["w1r"] = w1_full[:output_dim]                # [out_dim, h]
    p["w1t"] = w1_full[output_dim:output_dim + 1]  # [1, h]
    p["w2"], p["b2"] = _init_linear(keys[6], h_dim, h_dim)
    p["w3"], p["b3"] = _init_linear(keys[7], h_dim, h_dim // 2)
    p["w4"], p["b4"] = _init_linear(keys[8], h_dim // 2, h_dim // 4)
    p["wl"], p["bl"] = _init_linear(keys[9], h_dim // 4, 1)
    return p


def pack_params(p, num_experts, matmul_dtype=jnp.bfloat16):
    """Pack expert/gating weights into the fused layouts the kernel expects.
    Matmul weights are stored in `matmul_dtype` (bf16); biases stay f32."""
    E = num_experts
    in_dim, h_dim = p["we1"].shape[1], p["we1"].shape[2]
    out_dim = p["we2"].shape[2]

    # expert fc1 concatenated along output features: [in, E*h]
    we1_cat = jnp.transpose(p["we1"], (1, 0, 2)).reshape(in_dim, E * h_dim)
    be1_cat = p["be1"].reshape(1, E * h_dim)
    # fused first layer = [gating fc1 | expert fc1's], plus a zero row for the t column
    w_first = jnp.concatenate([p["wg1"], we1_cat], axis=1)          # [in, 128+E*h]
    w_first = jnp.concatenate(
        [w_first, jnp.zeros((1, w_first.shape[1]), jnp.float32)], axis=0)
    b_first = jnp.concatenate([p["bg1"], be1_cat], axis=1)          # [1, 128+E*h]

    # expert fc2 as one block-diagonal matmul [E*h, E*out]
    we2_bd = jnp.zeros((E * h_dim, E * out_dim), jnp.float32)
    for e in range(E):
        we2_bd = we2_bd.at[e * h_dim:(e + 1) * h_dim,
                           e * out_dim:(e + 1) * out_dim].set(p["we2"][e])
    be2_flat = p["be2"].reshape(1, E * out_dim)

    # patterns for the vectorized per-expert softmax + gate-weighted combine
    ones_bd = jnp.kron(jnp.eye(E, dtype=jnp.float32),
                       jnp.ones((out_dim, out_dim), jnp.float32))   # [E*out, E*out]
    rep_pat = jnp.kron(jnp.eye(E, dtype=jnp.float32),
                       jnp.ones((1, out_dim), jnp.float32))         # [E, E*out]
    fold = jnp.kron(jnp.ones((E, 1), jnp.float32),
                    jnp.eye(out_dim, dtype=jnp.float32))            # [E*out, out]
    w1rf = fold @ p["w1r"]                                          # [E*out, h]

    mm = lambda w: w.astype(matmul_dtype)
    packed = dict(p)
    packed.update(
        w_first=mm(w_first), b_first=b_first,
        wg2=mm(p["wg2"]), wg3=mm(p["wg3"]), wg4=mm(p["wg4"]),
        we2_bd=mm(we2_bd), be2_flat=be2_flat,
        ones_bd=mm(ones_bd), rep_pat=mm(rep_pat),
        w1rf=mm(w1rf),
        w2=mm(p["w2"]), w3=mm(p["w3"]), w4=mm(p["w4"]), wl=mm(p["wl"]),
    )
    return packed


# --------------------------- plain-JAX reference ------------------------------
def _softmax_rows_ref(x):
    m = jnp.max(x, axis=-1, keepdims=True)
    e = jnp.exp(x - m)
    return e / jnp.sum(e, axis=-1, keepdims=True)


def reference(x, is_treat, p, *, num_experts):
    relu = lambda v: jnp.maximum(v, 0.0)
    lrelu = lambda v: jnp.where(v > 0, v, NEG_SLOPE * v)
    sm = _softmax_rows_ref
    t = is_treat.reshape(-1, 1).astype(jnp.float32)

    h = relu(x @ p["wg1"] + p["bg1"])
    h = lrelu(h @ p["wg2"] + p["bg2"])
    h = lrelu(h @ p["wg3"] + p["bg3"])
    gate = sm(h @ p["wg4"] + p["bg4"])
    r = 0.0
    for e in range(num_experts):
        he = relu(x @ p["we1"][e] + p["be1"][e])
        r = r + sm(he @ p["we2"][e] + p["be2"][e]) * gate[:, e:e + 1]

    def head(tc):
        h1 = relu(r @ p["w1r"] + tc * p["w1t"] + p["b1"])
        h2 = relu(h1 @ p["w2"] + p["b2"])
        h3 = relu(h2 @ p["w3"] + p["b3"])
        h4 = relu(h3 @ p["w4"] + p["b4"])
        return h4 @ p["wl"] + p["bl"]

    s_logit = head(t)
    _s_logit = head(1.0 - t)
    sp, _sp = jax.nn.sigmoid(s_logit), jax.nn.sigmoid(_s_logit)
    y0 = t * _sp + (1.0 - t) * sp
    y1 = t * sp + (1.0 - t) * _sp
    return s_logit, y1 - y0


if __name__ == "__main__":
    # Small shapes; B=50 is deliberately ragged to exercise the pad-to-full-tile
    # path and the >=2-step grid (two 32-row tiles, 14 padded rows).
    B, INPUT_DIM, H_DIM, OUTPUT_DIM, NUM_EXPERTS = 50, 32, 32, 4, 4

    key = jax.random.PRNGKey(0)
    kx, kt, kp = jax.random.split(key, 3)
    x = jax.random.normal(kx, (B, INPUT_DIM), jnp.float32)
    is_treat = jax.random.bernoulli(kt, 0.5, (B,)).astype(jnp.float32)
    params = make_params(kp, INPUT_DIM, H_DIM, OUTPUT_DIM, NUM_EXPERTS)
    packed = pack_params(params, NUM_EXPERTS)

    s_logit, uplift = m3tn2_forward(x, is_treat, packed)
    jax.block_until_ready((s_logit, uplift))

    ref_logit, ref_uplift = reference(x, is_treat, params, num_experts=NUM_EXPERTS)
    # Tolerance covers bf16 matmul inputs (f32 accumulation) and the approx EUP
    # reciprocal inside the expert softmax.
    assert jnp.allclose(s_logit, ref_logit, atol=3e-2, rtol=3e-2), (
        "s_logit max|err|=%g" % float(jnp.max(jnp.abs(s_logit - ref_logit))))
    assert jnp.allclose(uplift, ref_uplift, atol=3e-2, rtol=3e-2), (
        "uplift max|err|=%g" % float(jnp.max(jnp.abs(uplift - ref_uplift))))

    print("KERNEL_OK")
</pallas_src>

<mosaic_0001>
module attributes {stable_mosaic.version = 11 : i64} {
  func.func @m3tn2_kernel(%arg0: i32, %arg1: memref<32x33xf32, #tpu.memory_space<vmem>>, %arg2: memref<33x256xbf16, #tpu.memory_space<vmem>>, %arg3: memref<1x256xf32, #tpu.memory_space<vmem>>, %arg4: memref<128x256xbf16, #tpu.memory_space<vmem>>, %arg5: memref<1x256xf32, #tpu.memory_space<vmem>>, %arg6: memref<256x128xbf16, #tpu.memory_space<vmem>>, %arg7: memref<1x128xf32, #tpu.memory_space<vmem>>, %arg8: memref<128x4xbf16, #tpu.memory_space<vmem>>, %arg9: memref<1x4xf32, #tpu.memory_space<vmem>>, %arg10: memref<128x16xbf16, #tpu.memory_space<vmem>>, %arg11: memref<1x16xf32, #tpu.memory_space<vmem>>, %arg12: memref<16x16xbf16, #tpu.memory_space<vmem>>, %arg13: memref<4x16xbf16, #tpu.memory_space<vmem>>, %arg14: memref<16x32xbf16, #tpu.memory_space<vmem>>, %arg15: memref<1x32xf32, #tpu.memory_space<vmem>>, %arg16: memref<1x32xf32, #tpu.memory_space<vmem>>, %arg17: memref<32x32xbf16, #tpu.memory_space<vmem>>, %arg18: memref<1x32xf32, #tpu.memory_space<vmem>>, %arg19: memref<32x16xbf16, #tpu.memory_space<vmem>>, %arg20: memref<1x16xf32, #tpu.memory_space<vmem>>, %arg21: memref<16x8xbf16, #tpu.memory_space<vmem>>, %arg22: memref<1x8xf32, #tpu.memory_space<vmem>>, %arg23: memref<8x1xbf16, #tpu.memory_space<vmem>>, %arg24: memref<1x1xf32, #tpu.memory_space<vmem>>, %arg25: memref<32x2xf32, #tpu.memory_space<vmem>>) attributes {dimension_semantics = [#tpu.dimension_semantics<parallel>], iteration_bounds = array<i64: 2>, scalar_prefetch = 0 : i64, scratch_operands = 0 : i64, tpu.core_type = #tpu.core_type<tc>, window_params = [{transform_indices = @transform_0, window_bounds = array<i64: 32, 33>}, {pipeline_mode = #tpu.pipeline_mode<synchronous>, transform_indices = @transform_1, window_bounds = array<i64: 33, 256>}, {pipeline_mode = #tpu.pipeline_mode<synchronous>, transform_indices = @transform_2, window_bounds = array<i64: 1, 256>}, {pipeline_mode = #tpu.pipeline_mode<synchronous>, transform_indices = @transform_3, window_bounds = array<i64: 128, 256>}, {pipeline_mode = #tpu.pipeline_mode<synchronous>, transform_indices = @transform_4, window_bounds = array<i64: 1, 256>}, {pipeline_mode = #tpu.pipeline_mode<synchronous>, transform_indices = @transform_5, window_bounds = array<i64: 256, 128>}, {pipeline_mode = #tpu.pipeline_mode<synchronous>, transform_indices = @transform_6, window_bounds = array<i64: 1, 128>}, {pipeline_mode = #tpu.pipeline_mode<synchronous>, transform_indices = @transform_7, window_bounds = array<i64: 128, 4>}, {pipeline_mode = #tpu.pipeline_mode<synchronous>, transform_indices = @transform_8, window_bounds = array<i64: 1, 4>}, {pipeline_mode = #tpu.pipeline_mode<synchronous>, transform_indices = @transform_9, window_bounds = array<i64: 128, 16>}, {pipeline_mode = #tpu.pipeline_mode<synchronous>, transform_indices = @transform_10, window_bounds = array<i64: 1, 16>}, {pipeline_mode = #tpu.pipeline_mode<synchronous>, transform_indices = @transform_11, window_bounds = array<i64: 16, 16>}, {pipeline_mode = #tpu.pipeline_mode<synchronous>, transform_indices = @transform_12, window_bounds = array<i64: 4, 16>}, {pipeline_mode = #tpu.pipeline_mode<synchronous>, transform_indices = @transform_13, window_bounds = array<i64: 16, 32>}, {pipeline_mode = #tpu.pipeline_mode<synchronous>, transform_indices = @transform_14, window_bounds = array<i64: 1, 32>}, {pipeline_mode = #tpu.pipeline_mode<synchronous>, transform_indices = @transform_15, window_bounds = array<i64: 1, 32>}, {pipeline_mode = #tpu.pipeline_mode<synchronous>, transform_indices = @transform_16, window_bounds = array<i64: 32, 32>}, {pipeline_mode = #tpu.pipeline_mode<synchronous>, transform_indices = @transform_17, window_bounds = array<i64: 1, 32>}, {pipeline_mode = #tpu.pipeline_mode<synchronous>, transform_indices = @transform_18, window_bounds = array<i64: 32, 16>}, {pipeline_mode = #tpu.pipeline_mode<synchronous>, transform_indices = @transform_19, window_bounds = array<i64: 1, 16>}, {pipeline_mode = #tpu.pipeline_mode<synchronous>, transform_indices = @transform_20, window_bounds = array<i64: 16, 8>}, {pipeline_mode = #tpu.pipeline_mode<synchronous>, transform_indices = @transform_21, window_bounds = array<i64: 1, 8>}, {pipeline_mode = #tpu.pipeline_mode<synchronous>, transform_indices = @transform_22, window_bounds = array<i64: 8, 1>}, {pipeline_mode = #tpu.pipeline_mode<synchronous>, transform_indices = @transform_23, window_bounds = array<i64: 1, 1>}, {transform_indices = @transform_24, window_bounds = array<i64: 32, 2>}]} {
    %c0 = arith.constant 0 : index
    %c0_0 = arith.constant 0 : index
    %0 = vector.load %arg1[%c0, %c0_0] : memref<32x33xf32, #tpu.memory_space<vmem>>, vector<32x33xf32>
    %1 = vector.extract_strided_slice %0 {offsets = [0, 32], sizes = [32, 1], strides = [1, 1]} : vector<32x33xf32> to vector<32x1xf32>
    %2 = arith.truncf %0 : vector<32x33xf32> to vector<32x33xbf16>
    %c0_1 = arith.constant 0 : index
    %c0_2 = arith.constant 0 : index
    %3 = vector.load %arg2[%c0_1, %c0_2] : memref<33x256xbf16, #tpu.memory_space<vmem>>, vector<33x256xbf16>
    %cst = arith.constant dense<0.000000e+00> : vector<32x256xf32>
    %4 = tpu.matmul %2, %3, %cst {dimension_numbers = #tpu.dot_dimension_numbers<[1], [0], [0], [1], [0, 0, 1, 1], [], []>} : vector<32x33xbf16>, vector<33x256xbf16>, vector<32x256xf32> -> vector<32x256xf32>
    %c0_3 = arith.constant 0 : index
    %c0_4 = arith.constant 0 : index
    %5 = vector.load %arg3[%c0_3, %c0_4] : memref<1x256xf32, #tpu.memory_space<vmem>>, vector<1x256xf32>
    %6 = vector.broadcast %5 : vector<1x256xf32> to vector<32x256xf32>
    %7 = arith.addf %4, %6 : vector<32x256xf32>
    %cst_5 = arith.constant 0.000000e+00 : f32
    %8 = vector.broadcast %cst_5 : f32 to vector<32x256xf32>
    %9 = arith.maximumf %7, %8 : vector<32x256xf32>
    %10 = vector.extract_strided_slice %9 {offsets = [0, 0], sizes = [32, 128], strides = [1, 1]} : vector<32x256xf32> to vector<32x128xf32>
    %11 = vector.extract_strided_slice %9 {offsets = [0, 128], sizes = [32, 128], strides = [1, 1]} : vector<32x256xf32> to vector<32x128xf32>
    %12 = arith.truncf %10 : vector<32x128xf32> to vector<32x128xbf16>
    %c0_6 = arith.constant 0 : index
    %c0_7 = arith.constant 0 : index
    %13 = vector.load %arg4[%c0_6, %c0_7] : memref<128x256xbf16, #tpu.memory_space<vmem>>, vector<128x256xbf16>
    %cst_8 = arith.constant dense<0.000000e+00> : vector<32x256xf32>
    %14 = tpu.matmul %12, %13, %cst_8 {dimension_numbers = #tpu.dot_dimension_numbers<[1], [0], [0], [1], [0, 0, 1, 1], [], []>} : vector<32x128xbf16>, vector<128x256xbf16>, vector<32x256xf32> -> vector<32x256xf32>
    %c0_9 = arith.constant 0 : index
    %c0_10 = arith.constant 0 : index
    %15 = vector.load %arg5[%c0_9, %c0_10] : memref<1x256xf32, #tpu.memory_space<vmem>>, vector<1x256xf32>
    %16 = vector.broadcast %15 : vector<1x256xf32> to vector<32x256xf32>
    %17 = arith.addf %14, %16 : vector<32x256xf32>
    %cst_11 = arith.constant 0.00999999977 : f32
    %18 = vector.broadcast %cst_11 : f32 to vector<32x256xf32>
    %19 = arith.mulf %18, %17 : vector<32x256xf32>
    %20 = arith.maximumf %17, %19 : vector<32x256xf32>
    %21 = arith.truncf %20 : vector<32x256xf32> to vector<32x256xbf16>
    %c0_12 = arith.constant 0 : index
    %c0_13 = arith.constant 0 : index
    %22 = vector.load %arg6[%c0_12, %c0_13] : memref<256x128xbf16, #tpu.memory_space<vmem>>, vector<256x128xbf16>
    %cst_14 = arith.constant dense<0.000000e+00> : vector<32x128xf32>
    %23 = tpu.matmul %21, %22, %cst_14 {dimension_numbers = #tpu.dot_dimension_numbers<[1], [0], [0], [1], [0, 0, 1, 1], [], []>} : vector<32x256xbf16>, vector<256x128xbf16>, vector<32x128xf32> -> vector<32x128xf32>
    %c0_15 = arith.constant 0 : index
    %c0_16 = arith.constant 0 : index
    %24 = vector.load %arg7[%c0_15, %c0_16] : memref<1x128xf32, #tpu.memory_space<vmem>>, vector<1x128xf32>
    %25 = vector.broadcast %24 : vector<1x128xf32> to vector<32x128xf32>
    %26 = arith.addf %23, %25 : vector<32x128xf32>
    %cst_17 = arith.constant 0.00999999977 : f32
    %27 = vector.broadcast %cst_17 : f32 to vector<32x128xf32>
    %28 = arith.mulf %27, %26 : vector<32x128xf32>
    %29 = arith.maximumf %26, %28 : vector<32x128xf32>
    %30 = arith.truncf %29 : vector<32x128xf32> to vector<32x128xbf16>
    %c0_18 = arith.constant 0 : index
    %c0_19 = arith.constant 0 : index
    %31 = vector.load %arg8[%c0_18, %c0_19] : memref<128x4xbf16, #tpu.memory_space<vmem>>, vector<128x4xbf16>
    %cst_20 = arith.constant dense<0.000000e+00> : vector<32x4xf32>
    %32 = tpu.matmul %30, %31, %cst_20 {dimension_numbers = #tpu.dot_dimension_numbers<[1], [0], [0], [1], [0, 0, 1, 1], [], []>} : vector<32x128xbf16>, vector<128x4xbf16>, vector<32x4xf32> -> vector<32x4xf32>
    %c0_21 = arith.constant 0 : index
    %c0_22 = arith.constant 0 : index
    %33 = vector.load %arg9[%c0_21, %c0_22] : memref<1x4xf32, #tpu.memory_space<vmem>>, vector<1x4xf32>
    %34 = vector.broadcast %33 : vector<1x4xf32> to vector<32x4xf32>
    %35 = arith.addf %32, %34 : vector<32x4xf32>
    %cst_23 = arith.constant dense<0xFF800000> : vector<32xf32>
    %36 = vector.multi_reduction <maximumf>, %35, %cst_23 [1] : vector<32x4xf32> to vector<32xf32>
    %37 = vector.shape_cast %36 : vector<32xf32> to vector<32x1xf32>
    %38 = vector.broadcast %37 : vector<32x1xf32> to vector<32x4xf32>
    %39 = arith.subf %35, %38 : vector<32x4xf32>
    %40 = math.exp %39 : vector<32x4xf32>
    %cst_24 = arith.constant dense<0.000000e+00> : vector<32xf32>
    %41 = vector.multi_reduction <add>, %40, %cst_24 [1] : vector<32x4xf32> to vector<32xf32>
    %42 = vector.shape_cast %41 : vector<32xf32> to vector<32x1xf32>
    %43 = vector.broadcast %42 : vector<32x1xf32> to vector<32x4xf32>
    %44 = arith.divf %40, %43 : vector<32x4xf32>
    %45 = arith.truncf %11 : vector<32x128xf32> to vector<32x128xbf16>
    %c0_25 = arith.constant 0 : index
    %c0_26 = arith.constant 0 : index
    %46 = vector.load %arg10[%c0_25, %c0_26] : memref<128x16xbf16, #tpu.memory_space<vmem>>, vector<128x16xbf16>
    %cst_27 = arith.constant dense<0.000000e+00> : vector<32x16xf32>
    %47 = tpu.matmul %45, %46, %cst_27 {dimension_numbers = #tpu.dot_dimension_numbers<[1], [0], [0], [1], [0, 0, 1, 1], [], []>} : vector<32x128xbf16>, vector<128x16xbf16>, vector<32x16xf32> -> vector<32x16xf32>
    %c0_28 = arith.constant 0 : index
    %c0_29 = arith.constant 0 : index
    %48 = vector.load %arg11[%c0_28, %c0_29] : memref<1x16xf32, #tpu.memory_space<vmem>>, vector<1x16xf32>
    %49 = vector.broadcast %48 : vector<1x16xf32> to vector<32x16xf32>
    %50 = arith.addf %47, %49 : vector<32x16xf32>
    %cst_30 = arith.constant dense<0xFF800000> : vector<32xf32>
    %51 = vector.multi_reduction <maximumf>, %50, %cst_30 [1] : vector<32x16xf32> to vector<32xf32>
    %52 = vector.shape_cast %51 : vector<32xf32> to vector<32x1xf32>
    %53 = vector.broadcast %52 : vector<32x1xf32> to vector<32x16xf32>
    %54 = arith.subf %50, %53 : vector<32x16xf32>
    %55 = math.exp %54 : vector<32x16xf32>
    %56 = arith.truncf %55 : vector<32x16xf32> to vector<32x16xbf16>
    %c0_31 = arith.constant 0 : index
    %c0_32 = arith.constant 0 : index
    %57 = vector.load %arg12[%c0_31, %c0_32] : memref<16x16xbf16, #tpu.memory_space<vmem>>, vector<16x16xbf16>
    %cst_33 = arith.constant dense<0.000000e+00> : vector<32x16xf32>
    %58 = tpu.matmul %56, %57, %cst_33 {dimension_numbers = #tpu.dot_dimension_numbers<[1], [0], [0], [1], [0, 0, 1, 1], [], []>} : vector<32x16xbf16>, vector<16x16xbf16>, vector<32x16xf32> -> vector<32x16xf32>
    %59 = arith.truncf %44 : vector<32x4xf32> to vector<32x4xbf16>
    %c0_34 = arith.constant 0 : index
    %c0_35 = arith.constant 0 : index
    %60 = vector.load %arg13[%c0_34, %c0_35] : memref<4x16xbf16, #tpu.memory_space<vmem>>, vector<4x16xbf16>
    %cst_36 = arith.constant dense<0.000000e+00> : vector<32x16xf32>
    %61 = tpu.matmul %59, %60, %cst_36 {dimension_numbers = #tpu.dot_dimension_numbers<[1], [0], [0], [1], [0, 0, 1, 1], [], []>} : vector<32x4xbf16>, vector<4x16xbf16>, vector<32x16xf32> -> vector<32x16xf32>
    %62 = arith.mulf %55, %61 : vector<32x16xf32>
    %63 = tpu.reciprocal %58 {approx = true} : vector<32x16xf32> -> vector<32x16xf32>
    %64 = arith.mulf %62, %63 : vector<32x16xf32>
    %65 = arith.truncf %64 : vector<32x16xf32> to vector<32x16xbf16>
    %c0_37 = arith.constant 0 : index
    %c0_38 = arith.constant 0 : index
    %66 = vector.load %arg14[%c0_37, %c0_38] : memref<16x32xbf16, #tpu.memory_space<vmem>>, vector<16x32xbf16>
    %cst_39 = arith.constant dense<0.000000e+00> : vector<32x32xf32>
    %67 = tpu.matmul %65, %66, %cst_39 {dimension_numbers = #tpu.dot_dimension_numbers<[1], [0], [0], [1], [0, 0, 1, 1], [], []>} : vector<32x16xbf16>, vector<16x32xbf16>, vector<32x32xf32> -> vector<32x32xf32>
    %c0_40 = arith.constant 0 : index
    %c0_41 = arith.constant 0 : index
    %68 = vector.load %arg16[%c0_40, %c0_41] : memref<1x32xf32, #tpu.memory_space<vmem>>, vector<1x32xf32>
    %69 = vector.broadcast %68 : vector<1x32xf32> to vector<32x32xf32>
    %70 = arith.addf %67, %69 : vector<32x32xf32>
    %c0_42 = arith.constant 0 : index
    %c0_43 = arith.constant 0 : index
    %71 = vector.load %arg15[%c0_42, %c0_43] : memref<1x32xf32, #tpu.memory_space<vmem>>, vector<1x32xf32>
    %72 = vector.broadcast %1 : vector<32x1xf32> to vector<32x32xf32>
    %73 = vector.broadcast %71 : vector<1x32xf32> to vector<32x32xf32>
    %74 = arith.mulf %72, %73 : vector<32x32xf32>
    %75 = arith.addf %70, %74 : vector<32x32xf32>
    %cst_44 = arith.constant 0.000000e+00 : f32
    %76 = vector.broadcast %cst_44 : f32 to vector<32x32xf32>
    %77 = arith.maximumf %75, %76 : vector<32x32xf32>
    %cst_45 = arith.constant 1.000000e+00 : f32
    %78 = vector.broadcast %cst_45 : f32 to vector<32x1xf32>
    %79 = arith.subf %78, %1 : vector<32x1xf32>
    %80 = vector.broadcast %79 : vector<32x1xf32> to vector<32x32xf32>
    %81 = vector.broadcast %71 : vector<1x32xf32> to vector<32x32xf32>
    %82 = arith.mulf %80, %81 : vector<32x32xf32>
    %83 = arith.addf %70, %82 : vector<32x32xf32>
    %cst_46 = arith.constant 0.000000e+00 : f32
    %84 = vector.broadcast %cst_46 : f32 to vector<32x32xf32>
    %85 = arith.maximumf %83, %84 : vector<32x32xf32>
    %86 = tpu.concatenate %77, %85 in 0 : vector<32x32xf32>, vector<32x32xf32> -> vector<64x32xf32>
    %87 = arith.truncf %86 : vector<64x32xf32> to vector<64x32xbf16>
    %c0_47 = arith.constant 0 : index
    %c0_48 = arith.constant 0 : index
    %88 = vector.load %arg17[%c0_47, %c0_48] : memref<32x32xbf16, #tpu.memory_space<vmem>>, vector<32x32xbf16>
    %cst_49 = arith.constant dense<0.000000e+00> : vector<64x32xf32>
    %89 = tpu.matmul %87, %88, %cst_49 {dimension_numbers = #tpu.dot_dimension_numbers<[1], [0], [0], [1], [0, 0, 1, 1], [], []>} : vector<64x32xbf16>, vector<32x32xbf16>, vector<64x32xf32> -> vector<64x32xf32>
    %c0_50 = arith.constant 0 : index
    %c0_51 = arith.constant 0 : index
    %90 = vector.load %arg18[%c0_50, %c0_51] : memref<1x32xf32, #tpu.memory_space<vmem>>, vector<1x32xf32>
    %91 = vector.broadcast %90 : vector<1x32xf32> to vector<64x32xf32>
    %92 = arith.addf %89, %91 : vector<64x32xf32>
    %cst_52 = arith.constant 0.000000e+00 : f32
    %93 = vector.broadcast %cst_52 : f32 to vector<64x32xf32>
    %94 = arith.maximumf %92, %93 : vector<64x32xf32>
    %95 = arith.truncf %94 : vector<64x32xf32> to vector<64x32xbf16>
    %c0_53 = arith.constant 0 : index
    %c0_54 = arith.constant 0 : index
    %96 = vector.load %arg19[%c0_53, %c0_54] : memref<32x16xbf16, #tpu.memory_space<vmem>>, vector<32x16xbf16>
    %cst_55 = arith.constant dense<0.000000e+00> : vector<64x16xf32>
    %97 = tpu.matmul %95, %96, %cst_55 {dimension_numbers = #tpu.dot_dimension_numbers<[1], [0], [0], [1], [0, 0, 1, 1], [], []>} : vector<64x32xbf16>, vector<32x16xbf16>, vector<64x16xf32> -> vector<64x16xf32>
    %c0_56 = arith.constant 0 : index
    %c0_57 = arith.constant 0 : index
    %98 = vector.load %arg20[%c0_56, %c0_57] : memref<1x16xf32, #tpu.memory_space<vmem>>, vector<1x16xf32>
    %99 = vector.broadcast %98 : vector<1x16xf32> to vector<64x16xf32>
    %100 = arith.addf %97, %99 : vector<64x16xf32>
    %cst_58 = arith.constant 0.000000e+00 : f32
    %101 = vector.broadcast %cst_58 : f32 to vector<64x16xf32>
    %102 = arith.maximumf %100, %101 : vector<64x16xf32>
    %103 = arith.truncf %102 : vector<64x16xf32> to vector<64x16xbf16>
    %c0_59 = arith.constant 0 : index
    %c0_60 = arith.constant 0 : index
    %104 = vector.load %arg21[%c0_59, %c0_60] : memref<16x8xbf16, #tpu.memory_space<vmem>>, vector<16x8xbf16>
    %cst_61 = arith.constant dense<0.000000e+00> : vector<64x8xf32>
    %105 = tpu.matmul %103, %104, %cst_61 {dimension_numbers = #tpu.dot_dimension_numbers<[1], [0], [0], [1], [0, 0, 1, 1], [], []>} : vector<64x16xbf16>, vector<16x8xbf16>, vector<64x8xf32> -> vector<64x8xf32>
    %c0_62 = arith.constant 0 : index
    %c0_63 = arith.constant 0 : index
    %106 = vector.load %arg22[%c0_62, %c0_63] : memref<1x8xf32, #tpu.memory_space<vmem>>, vector<1x8xf32>
    %107 = vector.broadcast %106 : vector<1x8xf32> to vector<64x8xf32>
    %108 = arith.addf %105, %107 : vector<64x8xf32>
    %cst_64 = arith.constant 0.000000e+00 : f32
    %109 = vector.broadcast %cst_64 : f32 to vector<64x8xf32>
    %110 = arith.maximumf %108, %109 : vector<64x8xf32>
    %111 = arith.truncf %110 : vector<64x8xf32> to vector<64x8xbf16>
    %c0_65 = arith.constant 0 : index
    %c0_66 = arith.constant 0 : index
    %112 = vector.load %arg23[%c0_65, %c0_66] : memref<8x1xbf16, #tpu.memory_space<vmem>>, vector<8x1xbf16>
    %cst_67 = arith.constant dense<0.000000e+00> : vector<64x1xf32>
    %113 = tpu.matmul %111, %112, %cst_67 {dimension_numbers = #tpu.dot_dimension_numbers<[1], [0], [0], [1], [0, 0, 1, 1], [], []>} : vector<64x8xbf16>, vector<8x1xbf16>, vector<64x1xf32> -> vector<64x1xf32>
    %c0_68 = arith.constant 0 : index
    %c0_69 = arith.constant 0 : index
    %114 = vector.load %arg24[%c0_68, %c0_69] : memref<1x1xf32, #tpu.memory_space<vmem>>, vector<1x1xf32>
    %115 = vector.broadcast %114 : vector<1x1xf32> to vector<64x1xf32>
    %116 = arith.addf %113, %115 : vector<64x1xf32>
    %117 = vector.extract_strided_slice %116 {offsets = [0, 0], sizes = [32, 1], strides = [1, 1]} : vector<64x1xf32> to vector<32x1xf32>
    %118 = arith.negf %117 : vector<32x1xf32>
    %119 = math.exp %118 : vector<32x1xf32>
    %cst_70 = arith.constant 1.000000e+00 : f32
    %120 = vector.broadcast %cst_70 : f32 to vector<32x1xf32>
    %121 = arith.addf %120, %119 : vector<32x1xf32>
    %122 = arith.divf %120, %121 : vector<32x1xf32>
    %123 = vector.extract_strided_slice %116 {offsets = [32, 0], sizes = [32, 1], strides = [1, 1]} : vector<64x1xf32> to vector<32x1xf32>
    %124 = arith.negf %123 : vector<32x1xf32>
    %125 = math.exp %124 : vector<32x1xf32>
    %cst_71 = arith.constant 1.000000e+00 : f32
    %126 = vector.broadcast %cst_71 : f32 to vector<32x1xf32>
    %127 = arith.addf %126, %125 : vector<32x1xf32>
    %128 = arith.divf %126, %127 : vector<32x1xf32>
    %129 = arith.mulf %1, %128 : vector<32x1xf32>
    %cst_72 = arith.constant 1.000000e+00 : f32
    %130 = vector.broadcast %cst_72 : f32 to vector<32x1xf32>
    %131 = arith.subf %130, %1 : vector<32x1xf32>
    %132 = arith.mulf %131, %122 : vector<32x1xf32>
    %133 = arith.addf %129, %132 : vector<32x1xf32>
    %134 = arith.mulf %1, %122 : vector<32x1xf32>
    %cst_73 = arith.constant 1.000000e+00 : f32
    %135 = vector.broadcast %cst_73 : f32 to vector<32x1xf32>
    %136 = arith.subf %135, %1 : vector<32x1xf32>
    %137 = arith.mulf %136, %128 : vector<32x1xf32>
    %138 = arith.addf %134, %137 : vector<32x1xf32>
    %139 = arith.subf %138, %133 : vector<32x1xf32>
    %140 = tpu.concatenate %117, %139 in 1 : vector<32x1xf32>, vector<32x1xf32> -> vector<32x2xf32>
    %c0_74 = arith.constant 0 : index
    %c0_75 = arith.constant 0 : index
    %141 = vector.load %arg25[%c0_74, %c0_75] : memref<32x2xf32, #tpu.memory_space<vmem>>, vector<32x2xf32>
    tpu.vector_store %arg25[%c0_74, %c0_75], %140 {strides = array<i32>} : memref<32x2xf32, #tpu.memory_space<vmem>>, vector<32x2xf32>,
    return
  }
  func.func @transform_0(%arg0: i32) -> (i32, i32) {
    %c0_i32 = arith.constant 0 : i32
    %c0_i32_0 = arith.constant 0 : i32
    return %arg0, %c0_i32 : i32, i32
  }
  func.func @transform_1(%arg0: i32) -> (i32, i32) {
    %c0_i32 = arith.constant 0 : i32
    %c0_i32_0 = arith.constant 0 : i32
    %c0_i32_1 = arith.constant 0 : i32
    return %c0_i32, %c0_i32_0 : i32, i32
  }
  func.func @transform_2(%arg0: i32) -> (i32, i32) {
    %c0_i32 = arith.constant 0 : i32
    %c0_i32_0 = arith.constant 0 : i32
    %c0_i32_1 = arith.constant 0 : i32
    return %c0_i32, %c0_i32_0 : i32, i32
  }
  func.func @transform_3(%arg0: i32) -> (i32, i32) {
    %c0_i32 = arith.constant 0 : i32
    %c0_i32_0 = arith.constant 0 : i32
    %c0_i32_1 = arith.constant 0 : i32
    return %c0_i32, %c0_i32_0 : i32, i32
  }
  func.func @transform_4(%arg0: i32) -> (i32, i32) {
    %c0_i32 = arith.constant 0 : i32
    %c0_i32_0 = arith.constant 0 : i32
    %c0_i32_1 = arith.constant 0 : i32
    return %c0_i32, %c0_i32_0 : i32, i32
  }
  func.func @transform_5(%arg0: i32) -> (i32, i32) {
    %c0_i32 = arith.constant 0 : i32
    %c0_i32_0 = arith.constant 0 : i32
    %c0_i32_1 = arith.constant 0 : i32
    return %c0_i32, %c0_i32_0 : i32, i32
  }
  func.func @transform_6(%arg0: i32) -> (i32, i32) {
    %c0_i32 = arith.constant 0 : i32
    %c0_i32_0 = arith.constant 0 : i32
    %c0_i32_1 = arith.constant 0 : i32
    return %c0_i32, %c0_i32_0 : i32, i32
  }
  func.func @transform_7(%arg0: i32) -> (i32, i32) {
    %c0_i32 = arith.constant 0 : i32
    %c0_i32_0 = arith.constant 0 : i32
    %c0_i32_1 = arith.constant 0 : i32
    return %c0_i32, %c0_i32_0 : i32, i32
  }
  func.func @transform_8(%arg0: i32) -> (i32, i32) {
    %c0_i32 = arith.constant 0 : i32
    %c0_i32_0 = arith.constant 0 : i32
    %c0_i32_1 = arith.constant 0 : i32
    return %c0_i32, %c0_i32_0 : i32, i32
  }
  func.func @transform_9(%arg0: i32) -> (i32, i32) {
    %c0_i32 = arith.constant 0 : i32
    %c0_i32_0 = arith.constant 0 : i32
    %c0_i32_1 = arith.constant 0 : i32
    return %c0_i32, %c0_i32_0 : i32, i32
  }
  func.func @transform_10(%arg0: i32) -> (i32, i32) {
    %c0_i32 = arith.constant 0 : i32
    %c0_i32_0 = arith.constant 0 : i32
    %c0_i32_1 = arith.constant 0 : i32
    return %c0_i32, %c0_i32_0 : i32, i32
  }
  func.func @transform_11(%arg0: i32) -> (i32, i32) {
    %c0_i32 = arith.constant 0 : i32
    %c0_i32_0 = arith.constant 0 : i32
    %c0_i32_1 = arith.constant 0 : i32
    return %c0_i32, %c0_i32_0 : i32, i32
  }
  func.func @transform_12(%arg0: i32) -> (i32, i32) {
    %c0_i32 = arith.constant 0 : i32
    %c0_i32_0 = arith.constant 0 : i32
    %c0_i32_1 = arith.constant 0 : i32
    return %c0_i32, %c0_i32_0 : i32, i32
  }
  func.func @transform_13(%arg0: i32) -> (i32, i32) {
    %c0_i32 = arith.constant 0 : i32
    %c0_i32_0 = arith.constant 0 : i32
    %c0_i32_1 = arith.constant 0 : i32
    return %c0_i32, %c0_i32_0 : i32, i32
  }
  func.func @transform_14(%arg0: i32) -> (i32, i32) {
    %c0_i32 = arith.constant 0 : i32
    %c0_i32_0 = arith.constant 0 : i32
    %c0_i32_1 = arith.constant 0 : i32
    return %c0_i32, %c0_i32_0 : i32, i32
  }
  func.func @transform_15(%arg0: i32) -> (i32, i32) {
    %c0_i32 = arith.constant 0 : i32
    %c0_i32_0 = arith.constant 0 : i32
    %c0_i32_1 = arith.constant 0 : i32
    return %c0_i32, %c0_i32_0 : i32, i32
  }
  func.func @transform_16(%arg0: i32) -> (i32, i32) {
    %c0_i32 = arith.constant 0 : i32
    %c0_i32_0 = arith.constant 0 : i32
    %c0_i32_1 = arith.constant 0 : i32
    return %c0_i32, %c0_i32_0 : i32, i32
  }
  func.func @transform_17(%arg0: i32) -> (i32, i32) {
    %c0_i32 = arith.constant 0 : i32
    %c0_i32_0 = arith.constant 0 : i32
    %c0_i32_1 = arith.constant 0 : i32
    return %c0_i32, %c0_i32_0 : i32, i32
  }
  func.func @transform_18(%arg0: i32) -> (i32, i32) {
    %c0_i32 = arith.constant 0 : i32
    %c0_i32_0 = arith.constant 0 : i32
    %c0_i32_1 = arith.constant 0 : i32
    return %c0_i32, %c0_i32_0 : i32, i32
  }
  func.func @transform_19(%arg0: i32) -> (i32, i32) {
    %c0_i32 = arith.constant 0 : i32
    %c0_i32_0 = arith.constant 0 : i32
    %c0_i32_1 = arith.constant 0 : i32
    return %c0_i32, %c0_i32_0 : i32, i32
  }
  func.func @transform_20(%arg0: i32) -> (i32, i32) {
    %c0_i32 = arith.constant 0 : i32
    %c0_i32_0 = arith.constant 0 : i32
    %c0_i32_1 = arith.constant 0 : i32
    return %c0_i32, %c0_i32_0 : i32, i32
  }
  func.func @transform_21(%arg0: i32) -> (i32, i32) {
    %c0_i32 = arith.constant 0 : i32
    %c0_i32_0 = arith.constant 0 : i32
    %c0_i32_1 = arith.constant 0 : i32
    return %c0_i32, %c0_i32_0 : i32, i32
  }
  func.func @transform_22(%arg0: i32) -> (i32, i32) {
    %c0_i32 = arith.constant 0 : i32
    %c0_i32_0 = arith.constant 0 : i32
    %c0_i32_1 = arith.constant 0 : i32
    return %c0_i32, %c0_i32_0 : i32, i32
  }
  func.func @transform_23(%arg0: i32) -> (i32, i32) {
    %c0_i32 = arith.constant 0 : i32
    %c0_i32_0 = arith.constant 0 : i32
    %c0_i32_1 = arith.constant 0 : i32
    return %c0_i32, %c0_i32_0 : i32, i32
  }
  func.func @transform_24(%arg0: i32) -> (i32, i32) {
    %c0_i32 = arith.constant 0 : i32
    %c0_i32_0 = arith.constant 0 : i32
    return %arg0, %c0_i32 : i32, i32
  }
}

</mosaic_0001>

<llo_original>
// kernel: tpu_custom_call.1
$region0: #{tpu_custom_call.1}
  #allocation0 [shape = 'u32[]', space=smem, size = 0x4, offset = 0x4, fixed_abs, tag = 'smem constant byte address 0x4 - core index']
  #allocation1 [shape = 'u32[144,128]{1,0:T(1,128)}', space=vmem, size = 0x12000, scoped, tag = 'internal scratch']
  #allocation2 [shape = 'f32[1,1]{1,0:T(1,128)S(1)}', space=vmem, size = 0x200, scoped, tag = 'scoped memory for tpu_custom_call.1']
  %s0 = inlined_call_operand.vmem [shape: f32[64,33], index: 0, kind: input, shape index: {}]
  %s1 = inlined_call_operand.hbm [shape: bf16[33,256], index: 1, kind: input, shape index: {}]
  %s2 = inlined_call_operand.hbm [shape: f32[1,256], index: 2, kind: input, shape index: {}]
  %s3 = inlined_call_operand.vmem [shape: bf16[128,256], index: 3, kind: input, shape index: {}]
  %s4 = inlined_call_operand.hbm [shape: f32[1,256], index: 4, kind: input, shape index: {}]
  %s5 = inlined_call_operand.vmem [shape: bf16[256,128], index: 5, kind: input, shape index: {}]
  %s6 = inlined_call_operand.vmem [shape: f32[1,128], index: 6, kind: input, shape index: {}]
  %s7 = inlined_call_operand.vmem [shape: bf16[128,4], index: 7, kind: input, shape index: {}]
  %s8 = inlined_call_operand.vmem [shape: f32[1,4], index: 8, kind: input, shape index: {}]
  %s9 = inlined_call_operand.vmem [shape: bf16[128,16], index: 9, kind: input, shape index: {}]
  %s10 = inlined_call_operand.vmem [shape: f32[1,16], index: 10, kind: input, shape index: {}]
  %s11 = inlined_call_operand.vmem [shape: bf16[16,16], index: 11, kind: input, shape index: {}]
  %s12 = inlined_call_operand.vmem [shape: bf16[4,16], index: 12, kind: input, shape index: {}]
  %s13 = inlined_call_operand.vmem [shape: bf16[16,32], index: 13, kind: input, shape index: {}]
  %s14 = inlined_call_operand.vmem [shape: f32[1,32], index: 14, kind: input, shape index: {}]
  %s15 = inlined_call_operand.vmem [shape: f32[1,32], index: 15, kind: input, shape index: {}]
  %s16 = inlined_call_operand.vmem [shape: bf16[32,32], index: 16, kind: input, shape index: {}]
  %s17 = inlined_call_operand.vmem [shape: f32[1,32], index: 17, kind: input, shape index: {}]
  %s18 = inlined_call_operand.vmem [shape: bf16[32,16], index: 18, kind: input, shape index: {}]
  %s19 = inlined_call_operand.vmem [shape: f32[1,16], index: 19, kind: input, shape index: {}]
  %s20 = inlined_call_operand.vmem [shape: bf16[16,8], index: 20, kind: input, shape index: {}]
  %s21 = inlined_call_operand.vmem [shape: f32[1,8], index: 21, kind: input, shape index: {}]
  %s22 = inlined_call_operand.vmem [shape: bf16[8,1], index: 22, kind: input, shape index: {}]
  %s23 = inlined_call_operand.<no memory space> [shape: f32[1,1], index: 23, kind: input, shape index: {}]
  %s24 = inlined_call_operand.vmem [shape: f32[64,2], index: 24, kind: output, shape index: {}]
  %s25 = sld [smem:[#allocation0]]
  $region141: #{tpu_custom_call.1} parent=0
    _
  %s27 = ssub.s32 1, %s25
  %s28 = scalar_select 0, %s27, %s25
  %v29 = vstv %s23
  %30 = vst [vmem:[#allocation2] sm:$0x1] %v29
  $region1: #{tpu_custom_call.1} parent=0
    #allocation3 [shape = 'u8[20480]{0}', space=vmem, size = 0x5000, scoped, tag = 'input window, operand 1, single buffered']
    #allocation4 [shape = 's32[2]{0}', space=sflag, size = 0x8, scoped, tag = 'scoped memory for tpu_custom_call.1']
    #allocation5 [shape = 'u8[1024]{0}', space=vmem, size = 0x400, scoped, tag = 'input window, operand 2, single buffered']
    #allocation6 [shape = 's32[1]{0}', space=sflag, size = 0x4, scoped, tag = 'scoped memory for tpu_custom_call.1']
    #allocation7 [shape = 'u8[1024]{0}', space=vmem, size = 0x400, scoped, tag = 'input window, operand 4, single buffered']
    %31 = vsyncpa [#allocation4], 0
    %32 = vsyncpa [#allocation6], 0
    loop: start=0, step=1, limit=4
    $region2: #{tpu_custom_call.1} parent=1 // loop_pre_header
      _
    $region3: #{tpu_custom_call.1} parent=1 // loop_header
      %s34 = sphi 0, %s38
      %p35 = scmp.ge.s32.totalorder %s34, 4
      %s44 = sphi 0, %s46
      %s47 = sphi 0, %s44
      %s48 = sphi 0, %s47
      %s64 = sphi 0, %s48
      %s68 = sphi 0, %s68
      %s70 = sphi 0, %s68
      %s71 = sphi 0, %s70
      %s85 = sphi 0, %s71
      %s89 = sphi 0, %s89
      %s91 = sphi 0, %s89
      %s92 = sphi 0, %s91
      %s106 = sphi 0, %s92
      %s110 = sphi 0, %s110
      %s112 = sphi 0, %s110
      %s113 = sphi 0, %s112
      %s127 = sphi 0, %s113
      %s131 = sphi 0, %s131
      %s133 = sphi 0, %s131
      %s134 = sphi 0, %s133
      %s148 = sphi 0, %s134
      %s152 = sphi 0, %s152
      %s154 = sphi 0, %s152
      %s155 = sphi 0, %s154
      %s169 = sphi 0, %s155
      %s173 = sphi 0, %s173
      %s175 = sphi 0, %s173
      %s176 = sphi 0, %s175
      %s190 = sphi 0, %s176
      %s194 = sphi 0, %s194
      %s196 = sphi 0, %s194
      %s197 = sphi 0, %s196
      %s211 = sphi 0, %s197
      %s215 = sphi 0, %s215
      %s217 = sphi 0, %s215
      %s218 = sphi 0, %s217
      %s232 = sphi 0, %s218
      %s236 = sphi 0, %s236
      %s238 = sphi 0, %s236
      %s239 = sphi 0, %s238
      %s253 = sphi 0, %s239
      %s257 = sphi 0, %s257
      %s259 = sphi 0, %s257
      %s260 = sphi 0, %s259
      %s274 = sphi 0, %s260
      %s278 = sphi 0, %s278
      %s280 = sphi 0, %s278
      %s281 = sphi 0, %s280
      %s295 = sphi 0, %s281
      %s299 = sphi 0, %s299
      %s301 = sphi 0, %s299
      %s302 = sphi 0, %s301
      %s316 = sphi 0, %s302
      %s320 = sphi 0, %s320
      %s322 = sphi 0, %s320
      %s323 = sphi 0, %s322
      %s337 = sphi 0, %s323
      %s341 = sphi 0, %s341
      %s343 = sphi 0, %s341
      %s344 = sphi 0, %s343
      %s358 = sphi 0, %s344
      %s362 = sphi 0, %s362
      %s364 = sphi 0, %s362
      %s365 = sphi 0, %s364
      %s379 = sphi 0, %s365
      %s383 = sphi 0, %s383
      %s385 = sphi 0, %s383
      %s386 = sphi 0, %s385
      %s400 = sphi 0, %s386
      %s404 = sphi 0, %s404
      %s406 = sphi 0, %s404
      %s407 = sphi 0, %s406
      %s421 = sphi 0, %s407
      %s425 = sphi 0, %s425
      %s427 = sphi 0, %s425
      %s428 = sphi 0, %s427
      %s442 = sphi 0, %s428
      %s446 = sphi 0, %s446
      %s448 = sphi 0, %s446
      %s449 = sphi 0, %s448
      %s463 = sphi 0, %s449
      %s467 = sphi 0, %s467
      %s469 = sphi 0, %s467
      %s470 = sphi 0, %s469
      %s484 = sphi 0, %s470
      %s488 = sphi 0, %s488
      %s490 = sphi 0, %s488
      %s491 = sphi 0, %s490
      %s505 = sphi 0, %s491
      %s509 = sphi 0, %s509
      %s511 = sphi 0, %s509
      %s512 = sphi 0, %s511
      %s526 = sphi 0, %s512
      %s530 = sphi 0, %s530
      %s532 = sphi 0, %s530
      %s533 = sphi 0, %s532
      %s547 = sphi 0, %s533
      %s553 = sphi 0, %s555
      %s556 = sphi 0, %s553
      %s557 = sphi 0, %s556
      %s573 = sphi 0, %s557
    $region4: #{tpu_custom_call.1} parent=1 // loop_header_branch
      %37 = sbr.rel (%p35) target = $region8
    $region5: #{tpu_custom_call.1} parent=1 // loop_body
      %s39 = ssub.s32 %s34, 1
      %s40 = ssub.s32 %s34, 2
      %s41 = sadd.s32 %s34, 1
      %s42 = ssub.s32 %s34, %s41
      %p43 = scmp.eq.s32.totalorder %s42, 0
      %s45 = sadd.s32 %s44, 1
      %s46 = scalar_select %p43, %s44, %s45
      %p49 = pneg %p43
      %p50 = scmp.eq.s32.totalorder %s34, 1
      %p51 = por %p49, %p50
      %p52 = scmp.ne.s32.totalorder %s44, %s47
      %p53 = scmp.eq.s32.totalorder %s34, 0
      %p54 = por %p52, %p53
      %p55 = scmp.ne.s32.totalorder %s44, %s47
      %p56 = scmp.eq.s32.totalorder %s39, 1
      %p57 = por %p55, %p56
      %p58 = scmp.ne.s32.totalorder %s47, %s48
      %p59 = scmp.eq.s32.totalorder %s39, 0
      %p60 = por %p58, %p59
      %p61 = scmp.ne.s32.totalorder %s47, %s48
      %p62 = scmp.eq.s32.totalorder %s40, 1
      %p63 = por %p61, %p62
      %p65 = scmp.ne.s32.totalorder %s48, %s64
      %p66 = scmp.eq.s32.totalorder %s40, 0
      %p67 = por %p65, %p66
      %s69 = sadd.s32 %s68, 1
      %p72 = scmp.eq.s32.totalorder %s34, 1
      %p73 = scmp.ne.s32.totalorder %s68, %s70
      %p74 = scmp.eq.s32.totalorder %s34, 0
      %p75 = por %p73, %p74
      %p76 = scmp.ne.s32.totalorder %s68, %s70
      %p77 = scmp.eq.s32.totalorder %s39, 1
      %p78 = por %p76, %p77
      %p79 = scmp.ne.s32.totalorder %s70, %s71
      %p80 = scmp.eq.s32.totalorder %s39, 0
      %p81 = por %p79, %p80
      %p82 = scmp.ne.s32.totalorder %s70, %s71
      %p83 = scmp.eq.s32.totalorder %s40, 1
      %p84 = por %p82, %p83
      %p86 = scmp.ne.s32.totalorder %s71, %s85
      %p87 = scmp.eq.s32.totalorder %s40, 0
      %p88 = por %p86, %p87
      %s90 = sadd.s32 %s89, 1
      %p93 = scmp.eq.s32.totalorder %s34, 1
      %p94 = scmp.ne.s32.totalorder %s89, %s91
      %p95 = scmp.eq.s32.totalorder %s34, 0
      %p96 = por %p94, %p95
      %p97 = scmp.ne.s32.totalorder %s89, %s91
      %p98 = scmp.eq.s32.totalorder %s39, 1
      %p99 = por %p97, %p98
      %p100 = scmp.ne.s32.totalorder %s91, %s92
      %p101 = scmp.eq.s32.totalorder %s39, 0
      %p102 = por %p100, %p101
      %p103 = scmp.ne.s32.totalorder %s91, %s92
      %p104 = scmp.eq.s32.totalorder %s40, 1
      %p105 = por %p103, %p104
      %p107 = scmp.ne.s32.totalorder %s92, %s106
      %p108 = scmp.eq.s32.totalorder %s40, 0
      %p109 = por %p107, %p108
      %s111 = sadd.s32 %s110, 1
      %p114 = scmp.eq.s32.totalorder %s34, 1
      %p115 = scmp.ne.s32.totalorder %s110, %s112
      %p116 = scmp.eq.s32.totalorder %s34, 0
      %p117 = por %p115, %p116
      %p118 = scmp.ne.s32.totalorder %s110, %s112
      %p119 = scmp.eq.s32.totalorder %s39, 1
      %p120 = por %p118, %p119
      %p121 = scmp.ne.s32.totalorder %s112, %s113
      %p122 = scmp.eq.s32.totalorder %s39, 0
      %p123 = por %p121, %p122
      %p124 = scmp.ne.s32.totalorder %s112, %s113
      %p125 = scmp.eq.s32.totalorder %s40, 1
      %p126 = por %p124, %p125
      %p128 = scmp.ne.s32.totalorder %s113, %s127
      %p129 = scmp.eq.s32.totalorder %s40, 0
      %p130 = por %p128, %p129
      %s132 = sadd.s32 %s131, 1
      %p135 = scmp.eq.s32.totalorder %s34, 1
      %p136 = scmp.ne.s32.totalorder %s131, %s133
      %p137 = scmp.eq.s32.totalorder %s34, 0
      %p138 = por %p136, %p137
      %p139 = scmp.ne.s32.totalorder %s131, %s133
      %p140 = scmp.eq.s32.totalorder %s39, 1
      %p141 = por %p139, %p140
      %p142 = scmp.ne.s32.totalorder %s133, %s134
      %p143 = scmp.eq.s32.totalorder %s39, 0
      %p144 = por %p142, %p143
      %p145 = scmp.ne.s32.totalorder %s133, %s134
      %p146 = scmp.eq.s32.totalorder %s40, 1
      %p147 = por %p145, %p146
      %p149 = scmp.ne.s32.totalorder %s134, %s148
      %p150 = scmp.eq.s32.totalorder %s40, 0
      %p151 = por %p149, %p150
      %s153 = sadd.s32 %s152, 1
      %p156 = scmp.eq.s32.totalorder %s34, 1
      %p157 = scmp.ne.s32.totalorder %s152, %s154
      %p158 = scmp.eq.s32.totalorder %s34, 0
      %p159 = por %p157, %p158
      %p160 = scmp.ne.s32.totalorder %s152, %s154
      %p161 = scmp.eq.s32.totalorder %s39, 1
      %p162 = por %p160, %p161
      %p163 = scmp.ne.s32.totalorder %s154, %s155
      %p164 = scmp.eq.s32.totalorder %s39, 0
      %p165 = por %p163, %p164
      %p166 = scmp.ne.s32.totalorder %s154, %s155
      %p167 = scmp.eq.s32.totalorder %s40, 1
      %p168 = por %p166, %p167
      %p170 = scmp.ne.s32.totalorder %s155, %s169
      %p171 = scmp.eq.s32.totalorder %s40, 0
      %p172 = por %p170, %p171
      %s174 = sadd.s32 %s173, 1
      %p177 = scmp.eq.s32.totalorder %s34, 1
      %p178 = scmp.ne.s32.totalorder %s173, %s175
      %p179 = scmp.eq.s32.totalorder %s34, 0
      %p180 = por %p178, %p179
      %p181 = scmp.ne.s32.totalorder %s173, %s175
      %p182 = scmp.eq.s32.totalorder %s39, 1
      %p183 = por %p181, %p182
      %p184 = scmp.ne.s32.totalorder %s175, %s176
      %p185 = scmp.eq.s32.totalorder %s39, 0
      %p186 = por %p184, %p185
      %p187 = scmp.ne.s32.totalorder %s175, %s176
      %p188 = scmp.eq.s32.totalorder %s40, 1
      %p189 = por %p187, %p188
      %p191 = scmp.ne.s32.totalorder %s176, %s190
      %p192 = scmp.eq.s32.totalorder %s40, 0
      %p193 = por %p191, %p192
      %s195 = sadd.s32 %s194, 1
      %p198 = scmp.eq.s32.totalorder %s34, 1
      %p199 = scmp.ne.s32.totalorder %s194, %s196
      %p200 = scmp.eq.s32.totalorder %s34, 0
      %p201 = por %p199, %p200
      %p202 = scmp.ne.s32.totalorder %s194, %s196
      %p203 = scmp.eq.s32.totalorder %s39, 1
      %p204 = por %p202, %p203
      %p205 = scmp.ne.s32.totalorder %s196, %s197
      %p206 = scmp.eq.s32.totalorder %s39, 0
      %p207 = por %p205, %p206
      %p208 = scmp.ne.s32.totalorder %s196, %s197
      %p209 = scmp.eq.s32.totalorder %s40, 1
      %p210 = por %p208, %p209
      %p212 = scmp.ne.s32.totalorder %s197, %s211
      %p213 = scmp.eq.s32.totalorder %s40, 0
      %p214 = por %p212, %p213
      %s216 = sadd.s32 %s215, 1
      %p219 = scmp.eq.s32.totalorder %s34, 1
      %p220 = scmp.ne.s32.totalorder %s215, %s217
      %p221 = scmp.eq.s32.totalorder %s34, 0
      %p222 = por %p220, %p221
      %p223 = scmp.ne.s32.totalorder %s215, %s217
      %p224 = scmp.eq.s32.totalorder %s39, 1
      %p225 = por %p223, %p224
      %p226 = scmp.ne.s32.totalorder %s217, %s218
      %p227 = scmp.eq.s32.totalorder %s39, 0
      %p228 = por %p226, %p227
      %p229 = scmp.ne.s32.totalorder %s217, %s218
      %p230 = scmp.eq.s32.totalorder %s40, 1
      %p231 = por %p229, %p230
      %p233 = scmp.ne.s32.totalorder %s218, %s232
      %p234 = scmp.eq.s32.totalorder %s40, 0
      %p235 = por %p233, %p234
      %s237 = sadd.s32 %s236, 1
      %p240 = scmp.eq.s32.totalorder %s34, 1
      %p241 = scmp.ne.s32.totalorder %s236, %s238
      %p242 = scmp.eq.s32.totalorder %s34, 0
      %p243 = por %p241, %p242
      %p244 = scmp.ne.s32.totalorder %s236, %s238
      %p245 = scmp.eq.s32.totalorder %s39, 1
      %p246 = por %p244, %p245
      %p247 = scmp.ne.s32.totalorder %s238, %s239
      %p248 = scmp.eq.s32.totalorder %s39, 0
      %p249 = por %p247, %p248
      %p250 = scmp.ne.s32.totalorder %s238, %s239
      %p251 = scmp.eq.s32.totalorder %s40, 1
      %p252 = por %p250, %p251
      %p254 = scmp.ne.s32.totalorder %s239, %s253
      %p255 = scmp.eq.s32.totalorder %s40, 0
      %p256 = por %p254, %p255
      %s258 = sadd.s32 %s257, 1
      %p261 = scmp.eq.s32.totalorder %s34, 1
      %p262 = scmp.ne.s32.totalorder %s257, %s259
      %p263 = scmp.eq.s32.totalorder %s34, 0
      %p264 = por %p262, %p263
      %p265 = scmp.ne.s32.totalorder %s257, %s259
      %p266 = scmp.eq.s32.totalorder %s39, 1
      %p267 = por %p265, %p266
      %p268 = scmp.ne.s32.totalorder %s259, %s260
      %p269 = scmp.eq.s32.totalorder %s39, 0
      %p270 = por %p268, %p269
      %p271 = scmp.ne.s32.totalorder %s259, %s260
      %p272 = scmp.eq.s32.totalorder %s40, 1
      %p273 = por %p271, %p272
      %p275 = scmp.ne.s32.totalorder %s260, %s274
      %p276 = scmp.eq.s32.totalorder %s40, 0
      %p277 = por %p275, %p276
      %s279 = sadd.s32 %s278, 1
      %p282 = scmp.eq.s32.totalorder %s34, 1
      %p283 = scmp.ne.s32.totalorder %s278, %s280
      %p284 = scmp.eq.s32.totalorder %s34, 0
      %p285 = por %p283, %p284
      %p286 = scmp.ne.s32.totalorder %s278, %s280
      %p287 = scmp.eq.s32.totalorder %s39, 1
      %p288 = por %p286, %p287
      %p289 = scmp.ne.s32.totalorder %s280, %s281
      %p290 = scmp.eq.s32.totalorder %s39, 0
      %p291 = por %p289, %p290
      %p292 = scmp.ne.s32.totalorder %s280, %s281
      %p293 = scmp.eq.s32.totalorder %s40, 1
      %p294 = por %p292, %p293
      %p296 = scmp.ne.s32.totalorder %s281, %s295
      %p297 = scmp.eq.s32.totalorder %s40, 0
      %p298 = por %p296, %p297
      %s300 = sadd.s32 %s299, 1
      %p303 = scmp.eq.s32.totalorder %s34, 1
      %p304 = scmp.ne.s32.totalorder %s299, %s301
      %p305 = scmp.eq.s32.totalorder %s34, 0
      %p306 = por %p304, %p305
      %p307 = scmp.ne.s32.totalorder %s299, %s301
      %p308 = scmp.eq.s32.totalorder %s39, 1
      %p309 = por %p307, %p308
      %p310 = scmp.ne.s32.totalorder %s301, %s302
      %p311 = scmp.eq.s32.totalorder %s39, 0
      %p312 = por %p310, %p311
      %p313 = scmp.ne.s32.totalorder %s301, %s302
      %p314 = scmp.eq.s32.totalorder %s40, 1
      %p315 = por %p313, %p314
      %p317 = scmp.ne.s32.totalorder %s302, %s316
      %p318 = scmp.eq.s32.totalorder %s40, 0
      %p319 = por %p317, %p318
      %s321 = sadd.s32 %s320, 1
      %p324 = scmp.eq.s32.totalorder %s34, 1
      %p325 = scmp.ne.s32.totalorder %s320, %s322
      %p326 = scmp.eq.s32.totalorder %s34, 0
      %p327 = por %p325, %p326
      %p328 = scmp.ne.s32.totalorder %s320, %s322
      %p329 = scmp.eq.s32.totalorder %s39, 1
      %p330 = por %p328, %p329
      %p331 = scmp.ne.s32.totalorder %s322, %s323
      %p332 = scmp.eq.s32.totalorder %s39, 0
      %p333 = por %p331, %p332
      %p334 = scmp.ne.s32.totalorder %s322, %s323
      %p335 = scmp.eq.s32.totalorder %s40, 1
      %p336 = por %p334, %p335
      %p338 = scmp.ne.s32.totalorder %s323, %s337
      %p339 = scmp.eq.s32.totalorder %s40, 0
      %p340 = por %p338, %p339
      %s342 = sadd.s32 %s341, 1
      %p345 = scmp.eq.s32.totalorder %s34, 1
      %p346 = scmp.ne.s32.totalorder %s341, %s343
      %p347 = scmp.eq.s32.totalorder %s34, 0
      %p348 = por %p346, %p347
      %p349 = scmp.ne.s32.totalorder %s341, %s343
      %p350 = scmp.eq.s32.totalorder %s39, 1
      %p351 = por %p349, %p350
      %p352 = scmp.ne.s32.totalorder %s343, %s344
      %p353 = scmp.eq.s32.totalorder %s39, 0
      %p354 = por %p352, %p353
      %p355 = scmp.ne.s32.totalorder %s343, %s344
      %p356 = scmp.eq.s32.totalorder %s40, 1
      %p357 = por %p355, %p356
      %p359 = scmp.ne.s32.totalorder %s344, %s358
      %p360 = scmp.eq.s32.totalorder %s40, 0
      %p361 = por %p359, %p360
      %s363 = sadd.s32 %s362, 1
      %p366 = scmp.eq.s32.totalorder %s34, 1
      %p367 = scmp.ne.s32.totalorder %s362, %s364
      %p368 = scmp.eq.s32.totalorder %s34, 0
      %p369 = por %p367, %p368
      %p370 = scmp.ne.s32.totalorder %s362, %s364
      %p371 = scmp.eq.s32.totalorder %s39, 1
      %p372 = por %p370, %p371
      %p373 = scmp.ne.s32.totalorder %s364, %s365
      %p374 = scmp.eq.s32.totalorder %s39, 0
      %p375 = por %p373, %p374
      %p376 = scmp.ne.s32.totalorder %s364, %s365
      %p377 = scmp.eq.s32.totalorder %s40, 1
      %p378 = por %p376, %p377
      %p380 = scmp.ne.s32.totalorder %s365, %s379
      %p381 = scmp.eq.s32.totalorder %s40, 0
      %p382 = por %p380, %p381
      %s384 = sadd.s32 %s383, 1
      %p387 = scmp.eq.s32.totalorder %s34, 1
      %p388 = scmp.ne.s32.totalorder %s383, %s385
      %p389 = scmp.eq.s32.totalorder %s34, 0
      %p390 = por %p388, %p389
      %p391 = scmp.ne.s32.totalorder %s383, %s385
      %p392 = scmp.eq.s32.totalorder %s39, 1
      %p393 = por %p391, %p392
      %p394 = scmp.ne.s32.totalorder %s385, %s386
      %p395 = scmp.eq.s32.totalorder %s39, 0
      %p396 = por %p394, %p395
      %p397 = scmp.ne.s32.totalorder %s385, %s386
      %p398 = scmp.eq.s32.totalorder %s40, 1
      %p399 = por %p397, %p398
      %p401 = scmp.ne.s32.totalorder %s386, %s400
      %p402 = scmp.eq.s32.totalorder %s40, 0
      %p403 = por %p401, %p402
      %s405 = sadd.s32 %s404, 1
      %p408 = scmp.eq.s32.totalorder %s34, 1
      %p409 = scmp.ne.s32.totalorder %s404, %s406
      %p410 = scmp.eq.s32.totalorder %s34, 0
      %p411 = por %p409, %p410
      %p412 = scmp.ne.s32.totalorder %s404, %s406
      %p413 = scmp.eq.s32.totalorder %s39, 1
      %p414 = por %p412, %p413
      %p415 = scmp.ne.s32.totalorder %s406, %s407
      %p416 = scmp.eq.s32.totalorder %s39, 0
      %p417 = por %p415, %p416
      %p418 = scmp.ne.s32.totalorder %s406, %s407
      %p419 = scmp.eq.s32.totalorder %s40, 1
      %p420 = por %p418, %p419
      %p422 = scmp.ne.s32.totalorder %s407, %s421
      %p423 = scmp.eq.s32.totalorder %s40, 0
      %p424 = por %p422, %p423
      %s426 = sadd.s32 %s425, 1
      %p429 = scmp.eq.s32.totalorder %s34, 1
      %p430 = scmp.ne.s32.totalorder %s425, %s427
      %p431 = scmp.eq.s32.totalorder %s34, 0
      %p432 = por %p430, %p431
      %p433 = scmp.ne.s32.totalorder %s425, %s427
      %p434 = scmp.eq.s32.totalorder %s39, 1
      %p435 = por %p433, %p434
      %p436 = scmp.ne.s32.totalorder %s427, %s428
      %p437 = scmp.eq.s32.totalorder %s39, 0
      %p438 = por %p436, %p437
      %p439 = scmp.ne.s32.totalorder %s427, %s428
      %p440 = scmp.eq.s32.totalorder %s40, 1
      %p441 = por %p439, %p440
      %p443 = scmp.ne.s32.totalorder %s428, %s442
      %p444 = scmp.eq.s32.totalorder %s40, 0
      %p445 = por %p443, %p444
      %s447 = sadd.s32 %s446, 1
      %p450 = scmp.eq.s32.totalorder %s34, 1
      %p451 = scmp.ne.s32.totalorder %s446, %s448
      %p452 = scmp.eq.s32.totalorder %s34, 0
      %p453 = por %p451, %p452
      %p454 = scmp.ne.s32.totalorder %s446, %s448
      %p455 = scmp.eq.s32.totalorder %s39, 1
      %p456 = por %p454, %p455
      %p457 = scmp.ne.s32.totalorder %s448, %s449
      %p458 = scmp.eq.s32.totalorder %s39, 0
      %p459 = por %p457, %p458
      %p460 = scmp.ne.s32.totalorder %s448, %s449
      %p461 = scmp.eq.s32.totalorder %s40, 1
      %p462 = por %p460, %p461
      %p464 = scmp.ne.s32.totalorder %s449, %s463
      %p465 = scmp.eq.s32.totalorder %s40, 0
      %p466 = por %p464, %p465
      %s468 = sadd.s32 %s467, 1
      %p471 = scmp.eq.s32.totalorder %s34, 1
      %p472 = scmp.ne.s32.totalorder %s467, %s469
      %p473 = scmp.eq.s32.totalorder %s34, 0
      %p474 = por %p472, %p473
      %p475 = scmp.ne.s32.totalorder %s467, %s469
      %p476 = scmp.eq.s32.totalorder %s39, 1
      %p477 = por %p475, %p476
      %p478 = scmp.ne.s32.totalorder %s469, %s470
      %p479 = scmp.eq.s32.totalorder %s39, 0
      %p480 = por %p478, %p479
      %p481 = scmp.ne.s32.totalorder %s469, %s470
      %p482 = scmp.eq.s32.totalorder %s40, 1
      %p483 = por %p481, %p482
      %p485 = scmp.ne.s32.totalorder %s470, %s484
      %p486 = scmp.eq.s32.totalorder %s40, 0
      %p487 = por %p485, %p486
      %s489 = sadd.s32 %s488, 1
      %p492 = scmp.eq.s32.totalorder %s34, 1
      %p493 = scmp.ne.s32.totalorder %s488, %s490
      %p494 = scmp.eq.s32.totalorder %s34, 0
      %p495 = por %p493, %p494
      %p496 = scmp.ne.s32.totalorder %s488, %s490
      %p497 = scmp.eq.s32.totalorder %s39, 1
      %p498 = por %p496, %p497
      %p499 = scmp.ne.s32.totalorder %s490, %s491
      %p500 = scmp.eq.s32.totalorder %s39, 0
      %p501 = por %p499, %p500
      %p502 = scmp.ne.s32.totalorder %s490, %s491
      %p503 = scmp.eq.s32.totalorder %s40, 1
      %p504 = por %p502, %p503
      %p506 = scmp.ne.s32.totalorder %s491, %s505
      %p507 = scmp.eq.s32.totalorder %s40, 0
      %p508 = por %p506, %p507
      %s510 = sadd.s32 %s509, 1
      %p513 = scmp.eq.s32.totalorder %s34, 1
      %p514 = scmp.ne.s32.totalorder %s509, %s511
      %p515 = scmp.eq.s32.totalorder %s34, 0
      %p516 = por %p514, %p515
      %p517 = scmp.ne.s32.totalorder %s509, %s511
      %p518 = scmp.eq.s32.totalorder %s39, 1
      %p519 = por %p517, %p518
      %p520 = scmp.ne.s32.totalorder %s511, %s512
      %p521 = scmp.eq.s32.totalorder %s39, 0
      %p522 = por %p520, %p521
      %p523 = scmp.ne.s32.totalorder %s511, %s512
      %p524 = scmp.eq.s32.totalorder %s40, 1
      %p525 = por %p523, %p524
      %p527 = scmp.ne.s32.totalorder %s512, %s526
      %p528 = scmp.eq.s32.totalorder %s40, 0
      %p529 = por %p527, %p528
      %s531 = sadd.s32 %s530, 1
      %p534 = scmp.eq.s32.totalorder %s34, 1
      %p535 = scmp.ne.s32.totalorder %s530, %s532
      %p536 = scmp.eq.s32.totalorder %s34, 0
      %p537 = por %p535, %p536
      %p538 = scmp.ne.s32.totalorder %s530, %s532
      %p539 = scmp.eq.s32.totalorder %s39, 1
      %p540 = por %p538, %p539
      %p541 = scmp.ne.s32.totalorder %s532, %s533
      %p542 = scmp.eq.s32.totalorder %s39, 0
      %p543 = por %p541, %p542
      %p544 = scmp.ne.s32.totalorder %s532, %s533
      %p545 = scmp.eq.s32.totalorder %s40, 1
      %p546 = por %p544, %p545
      %p548 = scmp.ne.s32.totalorder %s533, %s547
      %p549 = scmp.eq.s32.totalorder %s40, 0
      %p550 = por %p548, %p549
      %s551 = ssub.s32 %s34, %s41
      %p552 = scmp.eq.s32.totalorder %s551, 0
      %s554 = sadd.s32 %s553, 1
      %s555 = scalar_select %p552, %s553, %s554
      %p558 = pneg %p552
      %p559 = scmp.eq.s32.totalorder %s34, 1
      %p560 = por %p558, %p559
      %p561 = scmp.ne.s32.totalorder %s553, %s556
      %p562 = scmp.eq.s32.totalorder %s34, 0
      %p563 = por %p561, %p562
      %p564 = scmp.ne.s32.totalorder %s553, %s556
      %p565 = scmp.eq.s32.totalorder %s39, 1
      %p566 = por %p564, %p565
      %p567 = scmp.ne.s32.totalorder %s556, %s557
      %p568 = scmp.eq.s32.totalorder %s39, 0
      %p569 = por %p567, %p568
      %p570 = scmp.ne.s32.totalorder %s556, %s557
      %p571 = scmp.eq.s32.totalorder %s40, 1
      %p572 = por %p570, %p571
      %p574 = scmp.ne.s32.totalorder %s557, %s573
      %p575 = scmp.eq.s32.totalorder %s40, 0
      %p576 = por %p574, %p575
      %p577 = scmp.le.s32.totalorder 1, %s34
      %p578 = scmp.lt.s32.totalorder %s34, 3
      %p579 = pnand %p577, %p578
      %p580 = pneg %p579
      // Predicated region
      $region9: #{tpu_custom_call.1} parent=5 // pred_check
        _
      $region10: #{tpu_custom_call.1} parent=5 // pred_check_branch
        %582 = sbr.rel (%p579) target = $region12
      $region11: #{tpu_custom_call.1} parent=5 // pred_region
        %s583 = ssub.s32 %s34, 1
        // Predicated region
        $region13: #{tpu_custom_call.1} parent=11 // pred_check
          %p584 = pneg %p81
        $region14: #{tpu_custom_call.1} parent=11 // pred_check_branch
          %586 = sbr.rel (%p584) target = $region16
        $region15: #{tpu_custom_call.1} parent=11 // pred_region
          %s588 = ssub.s32 640, 640
          %589 = vsyncadd [#allocation4], %s588
          %s590 = sshll.u32 [#allocation3], 4
          %s591 = int_to_ptr.vmem [resolvable:$true] %s590
          %596 = dma.hbm_to_vmem [thread:$0]  %s1, 640, %s591, [#allocation4], 128, 128, 8
        $region16: #{tpu_custom_call.1} parent=11 // pred_fallthru
          _
        // Predicated region
        $region17: #{tpu_custom_call.1} parent=11 // pred_check
          %p597 = pneg %p102
        $region18: #{tpu_custom_call.1} parent=11 // pred_check_branch
          %599 = sbr.rel (%p597) target = $region20
        $region19: #{tpu_custom_call.1} parent=11 // pred_region
          %s601 = ssub.s32 32, 32
          %602 = vsyncadd [#allocation6], %s601
          %s604 = sshll.u32 [#allocation5], 4
          %s605 = int_to_ptr.vmem [resolvable:$true] %s604
          %607 = dma.hbm_to_vmem [thread:$0]  %s2, 32, %s605, [#allocation6]
        $region20: #{tpu_custom_call.1} parent=11 // pred_fallthru
          _
        // Predicated region
        $region21: #{tpu_custom_call.1} parent=11 // pred_check
          %p608 = pneg %p123
        $region22: #{tpu_custom_call.1} parent=11 // pred_check_branch
          %610 = sbr.rel (%p608) target = $region24
        $region23: #{tpu_custom_call.1} parent=11 // pred_region
          _
        $region24: #{tpu_custom_call.1} parent=11 // pred_fallthru
          _
        // Predicated region
        $region25: #{tpu_custom_call.1} parent=11 // pred_check
          %p611 = pneg %p144
        $region26: #{tpu_custom_call.1} parent=11 // pred_check_branch
          %613 = sbr.rel (%p611) target = $region28
        $region27: #{tpu_custom_call.1} parent=11 // pred_region
          %s615 = ssub.s32 32, 32
          %616 = vsyncadd [#allocation6], %s615
          %s618 = sshll.u32 [#allocation7], 4
          %s619 = int_to_ptr.vmem [resolvable:$true] %s618
          %621 = dma.hbm_to_vmem [thread:$0]  %s4, 32, %s619, [#allocation6]
        $region28: #{tpu_custom_call.1} parent=11 // pred_fallthru
          _
        // Predicated region
        $region29: #{tpu_custom_call.1} parent=11 // pred_check
          %p622 = pneg %p165
        $region30: #{tpu_custom_call.1} parent=11 // pred_check_branch
          %624 = sbr.rel (%p622) target = $region32
        $region31: #{tpu_custom_call.1} parent=11 // pred_region
          _
        $region32: #{tpu_custom_call.1} parent=11 // pred_fallthru
          _
        // Predicated region
        $region33: #{tpu_custom_call.1} parent=11 // pred_check
          %p625 = pneg %p186
        $region34: #{tpu_custom_call.1} parent=11 // pred_check_branch
          %627 = sbr.rel (%p625) target = $region36
        $region35: #{tpu_custom_call.1} parent=11 // pred_region
          _
        $region36: #{tpu_custom_call.1} parent=11 // pred_fallthru
          _
        // Predicated region
        $region37: #{tpu_custom_call.1} parent=11 // pred_check
          %p628 = pneg %p207
        $region38: #{tpu_custom_call.1} parent=11 // pred_check_branch
          %630 = sbr.rel (%p628) target = $region40
        $region39: #{tpu_custom_call.1} parent=11 // pred_region
          _
        $region40: #{tpu_custom_call.1} parent=11 // pred_fallthru
          _
        // Predicated region
        $region41: #{tpu_custom_call.1} parent=11 // pred_check
          %p631 = pneg %p228
        $region42: #{tpu_custom_call.1} parent=11 // pred_check_branch
          %633 = sbr.rel (%p631) target = $region44
        $region43: #{tpu_custom_call.1} parent=11 // pred_region
          _
        $region44: #{tpu_custom_call.1} parent=11 // pred_fallthru
          _
        // Predicated region
        $region45: #{tpu_custom_call.1} parent=11 // pred_check
          %p634 = pneg %p249
        $region46: #{tpu_custom_call.1} parent=11 // pred_check_branch
          %636 = sbr.rel (%p634) target = $region48
        $region47: #{tpu_custom_call.1} parent=11 // pred_region
          _
        $region48: #{tpu_custom_call.1} parent=11 // pred_fallthru
          _
        // Predicated region
        $region49: #{tpu_custom_call.1} parent=11 // pred_check
          %p637 = pneg %p270
        $region50: #{tpu_custom_call.1} parent=11 // pred_check_branch
          %639 = sbr.rel (%p637) target = $region52
        $region51: #{tpu_custom_call.1} parent=11 // pred_region
          _
        $region52: #{tpu_custom_call.1} parent=11 // pred_fallthru
          _
        // Predicated region
        $region53: #{tpu_custom_call.1} parent=11 // pred_check
          %p640 = pneg %p291
        $region54: #{tpu_custom_call.1} parent=11 // pred_check_branch
          %642 = sbr.rel (%p640) target = $region56
        $region55: #{tpu_custom_call.1} parent=11 // pred_region
          _
        $region56: #{tpu_custom_call.1} parent=11 // pred_fallthru
          _
        // Predicated region
        $region57: #{tpu_custom_call.1} parent=11 // pred_check
          %p643 = pneg %p312
        $region58: #{tpu_custom_call.1} parent=11 // pred_check_branch
          %645 = sbr.rel (%p643) target = $region60
        $region59: #{tpu_custom_call.1} parent=11 // pred_region
          _
        $region60: #{tpu_custom_call.1} parent=11 // pred_fallthru
          _
        // Predicated region
        $region61: #{tpu_custom_call.1} parent=11 // pred_check
          %p646 = pneg %p333
        $region62: #{tpu_custom_call.1} parent=11 // pred_check_branch
          %648 = sbr.rel (%p646) target = $region64
        $region63: #{tpu_custom_call.1} parent=11 // pred_region
          _
        $region64: #{tpu_custom_call.1} parent=11 // pred_fallthru
          _
        // Predicated region
        $region65: #{tpu_custom_call.1} parent=11 // pred_check
          %p649 = pneg %p354
        $region66: #{tpu_custom_call.1} parent=11 // pred_check_branch
          %651 = sbr.rel (%p649) target = $region68
        $region67: #{tpu_custom_call.1} parent=11 // pred_region
          _
        $region68: #{tpu_custom_call.1} parent=11 // pred_fallthru
          _
        // Predicated region
        $region69: #{tpu_custom_call.1} parent=11 // pred_check
          %p652 = pneg %p375
        $region70: #{tpu_custom_call.1} parent=11 // pred_check_branch
          %654 = sbr.rel (%p652) target = $region72
        $region71: #{tpu_custom_call.1} parent=11 // pred_region
          _
        $region72: #{tpu_custom_call.1} parent=11 // pred_fallthru
          _
        // Predicated region
        $region73: #{tpu_custom_call.1} parent=11 // pred_check
          %p655 = pneg %p396
        $region74: #{tpu_custom_call.1} parent=11 // pred_check_branch
          %657 = sbr.rel (%p655) target = $region76
        $region75: #{tpu_custom_call.1} parent=11 // pred_region
          _
        $region76: #{tpu_custom_call.1} parent=11 // pred_fallthru
          _
        // Predicated region
        $region77: #{tpu_custom_call.1} parent=11 // pred_check
          %p658 = pneg %p417
        $region78: #{tpu_custom_call.1} parent=11 // pred_check_branch
          %660 = sbr.rel (%p658) target = $region80
        $region79: #{tpu_custom_call.1} parent=11 // pred_region
          _
        $region80: #{tpu_custom_call.1} parent=11 // pred_fallthru
          _
        // Predicated region
        $region81: #{tpu_custom_call.1} parent=11 // pred_check
          %p661 = pneg %p438
        $region82: #{tpu_custom_call.1} parent=11 // pred_check_branch
          %663 = sbr.rel (%p661) target = $region84
        $region83: #{tpu_custom_call.1} parent=11 // pred_region
          _
        $region84: #{tpu_custom_call.1} parent=11 // pred_fallthru
          _
        // Predicated region
        $region85: #{tpu_custom_call.1} parent=11 // pred_check
          %p664 = pneg %p459
        $region86: #{tpu_custom_call.1} parent=11 // pred_check_branch
          %666 = sbr.rel (%p664) target = $region88
        $region87: #{tpu_custom_call.1} parent=11 // pred_region
          _
        $region88: #{tpu_custom_call.1} parent=11 // pred_fallthru
          _
        // Predicated region
        $region89: #{tpu_custom_call.1} parent=11 // pred_check
          %p667 = pneg %p480
        $region90: #{tpu_custom_call.1} parent=11 // pred_check_branch
          %669 = sbr.rel (%p667) target = $region92
        $region91: #{tpu_custom_call.1} parent=11 // pred_region
          _
        $region92: #{tpu_custom_call.1} parent=11 // pred_fallthru
          _
        // Predicated region
        $region93: #{tpu_custom_call.1} parent=11 // pred_check
          %p670 = pneg %p501
        $region94: #{tpu_custom_call.1} parent=11 // pred_check_branch
          %672 = sbr.rel (%p670) target = $region96
        $region95: #{tpu_custom_call.1} parent=11 // pred_region
          _
        $region96: #{tpu_custom_call.1} parent=11 // pred_fallthru
          _
        // Predicated region
        $region97: #{tpu_custom_call.1} parent=11 // pred_check
          %p673 = pneg %p522
        $region98: #{tpu_custom_call.1} parent=11 // pred_check_branch
          %675 = sbr.rel (%p673) target = $region100
        $region99: #{tpu_custom_call.1} parent=11 // pred_region
          _
        $region100: #{tpu_custom_call.1} parent=11 // pred_fallthru
          _
        // Predicated region
        $region101: #{tpu_custom_call.1} parent=11 // pred_check
          %p676 = pneg %p543
        $region102: #{tpu_custom_call.1} parent=11 // pred_check_branch
          %678 = sbr.rel (%p676) target = $region104
        $region103: #{tpu_custom_call.1} parent=11 // pred_region
          _
        $region104: #{tpu_custom_call.1} parent=11 // pred_fallthru
          _
      $region12: #{tpu_custom_call.1} parent=5 // pred_fallthru
        _
      %p679 = scmp.lt.s32.totalorder %s34, 2
      // Predicated region
      $region105: #{tpu_custom_call.1} parent=5 // pred_check
        %p680 = pneg %p679
      $region106: #{tpu_custom_call.1} parent=5 // pred_check_branch
        %682 = sbr.rel (%p680) target = $region108
      $region107: #{tpu_custom_call.1} parent=5 // pred_region
        // Predicated region
        $region109: #{tpu_custom_call.1} parent=107 // pred_check
          %p683 = pneg %p54
        $region110: #{tpu_custom_call.1} parent=107 // pred_check_branch
          %685 = sbr.rel (%p683) target = $region112
        $region111: #{tpu_custom_call.1} parent=107 // pred_region
          %s686 = smul.u32 4, %s34
          %p687 = scmp.lt.s32.totalorder %s686, 7
          %s688 = scalar_select %p687, %s686, 7
          %s689 = smul.addr %s688, 8
          %s690 = scalar_lea.vmem %s0, %s689
          %s691 = smul.u32 4, %s34
        $region112: #{tpu_custom_call.1} parent=107 // pred_fallthru
          _
      $region108: #{tpu_custom_call.1} parent=5 // pred_fallthru
        _
      %p692 = scmp.le.s32.totalorder 1, %s34
      %p693 = scmp.lt.s32.totalorder %s34, 3
      %p694 = pnand %p692, %p693
      %p695 = pneg %p694
      // Predicated region
      $region113: #{tpu_custom_call.1} parent=5 // pred_check
        _
      $region114: #{tpu_custom_call.1} parent=5 // pred_check_branch
        %697 = sbr.rel (%p694) target = $region116
      $region115: #{tpu_custom_call.1} parent=5 // pred_region
        %s698 = ssub.s32 %s34, 1
        // Predicated region
        $region117: #{tpu_custom_call.1} parent=115 // pred_check
          %p699 = pneg %p81
        $region118: #{tpu_custom_call.1} parent=115 // pred_check_branch
          %701 = sbr.rel (%p699) target = $region120
        $region119: #{tpu_custom_call.1} parent=115 // pred_region
          %702 = dma.done [#allocation4], 640
        $region120: #{tpu_custom_call.1} parent=115 // pred_fallthru
          _
        // Predicated region
        $region121: #{tpu_custom_call.1} parent=115 // pred_check
          %p703 = pneg %p102
        $region122: #{tpu_custom_call.1} parent=115 // pred_check_branch
          %705 = sbr.rel (%p703) target = $region124
        $region123: #{tpu_custom_call.1} parent=115 // pred_region
          %706 = dma.done [#allocation6], 32
        $region124: #{tpu_custom_call.1} parent=115 // pred_fallthru
          _
        // Predicated region
        $region125: #{tpu_custom_call.1} parent=115 // pred_check
          %p707 = pneg %p144
        $region126: #{tpu_custom_call.1} parent=115 // pred_check_branch
          %709 = sbr.rel (%p707) target = $region128
        $region127: #{tpu_custom_call.1} parent=115 // pred_region
          %710 = dma.done [#allocation6], 32
        $region128: #{tpu_custom_call.1} parent=115 // pred_fallthru
          _
        %s711 = smul.u32 4, %s39
        %p712 = scmp.lt.s32.totalorder %s711, 7
        %s713 = scalar_select %p712, %s711, 7
        %s714 = smul.addr %s713, 8
        %s715 = scalar_lea.vmem %s0, %s714
        %p716 = pneg %p60
        %p717 = pneg %p57
        %p718 = pneg %p81
        %p719 = pneg %p78
        %p720 = pneg %p102
        %p721 = pneg %p99
        %p722 = pneg %p123
        %p723 = pneg %p120
        %p724 = pneg %p144
        %p725 = pneg %p141
        %p726 = pneg %p165
        %p727 = pneg %p162
        %p728 = pneg %p186
        %p729 = pneg %p183
        %p730 = pneg %p207
        %p731 = pneg %p204
        %p732 = pneg %p228
        %p733 = pneg %p225
        %p734 = pneg %p249
        %p735 = pneg %p246
        %p736 = pneg %p270
        %p737 = pneg %p267
        %p738 = pneg %p291
        %p739 = pneg %p288
        %p740 = pneg %p312
        %p741 = pneg %p309
        %p742 = pneg %p333
        %p743 = pneg %p330
        %p744 = pneg %p354
        %p745 = pneg %p351
        %p746 = pneg %p375
        %p747 = pneg %p372
        %p748 = pneg %p396
        %p749 = pneg %p393
        %p750 = pneg %p417
        %p751 = pneg %p414
        %p752 = pneg %p438
        %p753 = pneg %p435
        %p754 = pneg %p459
        %p755 = pneg %p456
        %p756 = pneg %p480
        %p757 = pneg %p477
        %p758 = pneg %p501
        %p759 = pneg %p498
        %p760 = pneg %p522
        %p761 = pneg %p519
        %p762 = pneg %p543
        %p763 = pneg %p540
        %p764 = pneg %p569
        %p765 = pneg %p566
        %s766 = smul.u32 4, %s39
        %p767 = scmp.lt.s32.totalorder %s766, 7
        %s768 = scalar_select %p767, %s766, 7
        %s769 = smul.addr %s768, 8
        %s770 = scalar_lea.vmem %s24, %s769
        %s771 = smul.u32 4, %s39
        %p772 = scmp.lt.s32.totalorder %s771, 7
        %s773 = scalar_select %p772, %s771, 7
        %s774 = smul.addr %s773, 8
        %s775 = scalar_lea.vmem %s0, %s774
        %s776 = smul.u32 4, %s39
        %s777 = smul.u32 4, %s39
        %p778 = scmp.lt.s32.totalorder %s777, 7
        %s779 = scalar_select %p778, %s777, 7
        %s780 = smul.addr %s779, 8
        %s781 = scalar_lea.vmem %s24, %s780
        %s782 = smul.u32 4, %s39
        %v784 = vld [vmem:[%s775] sm:$0xff]
        %v785 = vld [vmem:[%s775 + $0x8] sm:$0xff]
        %v786 = vld [vmem:[%s775 + $0x10] sm:$0xff]
        %v787 = vld [vmem:[%s775 + $0x18] sm:$0xff]
        %v788 = vpack.c.bf16 %v785, %v784
        %v789 = vpack.c.bf16 %v787, %v786
        %v790 = vld [vmem:[#allocation3] sm:$0xff]
        %v791 = vld [vmem:[#allocation3 + $0x8] sm:$0xff]
        %v792 = vld [vmem:[#allocation3 + $0x10] sm:$0xff]
        %v793 = vld [vmem:[#allocation3 + $0x18] sm:$0xff]
        %v794 = vld [vmem:[#allocation3 + $0x20] sm:$0x11]
        %v795 = vld [vmem:[#allocation5] sm:$0x3]
        %v797 = vlaneseq
        %v798 = vshrl.u32 %v797, 7
        %v799 = vsub.s32 0, %v798
        %v800 = vrot.slane %v795, %v799
        %v801 = vlaneseq
        %v802 = vshrl.u32 %v801, 7
        %v803 = vsub.s32 1, %v802
        %v804 = vrot.slane %v795, %v803
        %v812 = vunpack.c.l.b16 %v790
        %v813 = vunpack.c.h.b16 %v790
        %v814 = vunpack.c.l.b16 %v791
        %v815 = vunpack.c.h.b16 %v791
        %v816 = vunpack.c.l.b16 %v792
        %v817 = vunpack.c.h.b16 %v792
        %v818 = vunpack.c.l.b16 %v793
        %v819 = vunpack.c.h.b16 %v793
        %v820 = vunpack.c.l.b16 %v794
        %v821 = vunpack.c.h.b16 %v794
        %v822 = vpack.c.b16 %v814, %v812
        %v823 = vpack.c.b16 %v815, %v813
        %v824 = vpack.c.b16 %v818, %v816
        %v825 = vpack.c.b16 %v819, %v817
        %v826 = vpack.c.b16 %v820, %v820
        %v827 = vpack.c.b16 %v821, %v821
        %vm832 = vcmask 269312
        %v834 = vsel %vm832, %v788, 0
        %v837 = vsel %vm832, %v789, 0
        %vm839 = vcmask 1040384
        %v840 = vsel 0, 4294967295, 65535
        %v841 = vsel %vm839, %v840, 0
        %v843 = vand.u32 %v826, %v841
        %v846 = vand.u32 %v827, %v841
        %848 = vmatprep.subr.bf16.mxu0 %v823
        %849 = vmatpush1.bf16.msra.mxu0 %v822
        %850 = vmatprep.subr.bf16.mxu0 %v825
        %851 = vmatpush1.bf16.msra.mxu0 %v824
        %852 = vmatprep.subr.bf16.mxu0 %v846
        %853 = vmatpush1.bf16.msra.mxu0 %v843
        %854 = vmatprep.subr.bf16.mxu0 0
        %855 = vmatpush1.bf16.msra.mxu0 0
        %856 = vmatprep.subr.bf16.mxu0 0
        %857 = vmatpush1.bf16.msra.mxu0 0
        %858 = vmatprep.subr.bf16.mxu0 0
        %859 = vmatpush1.bf16.msra.mxu0 0
        %860 = vmatprep.subr.bf16.mxu0 0
        %861 = vmatpush1.bf16.msra.mxu0 0
        %862 = vmatprep.subr.bf16.mxu0 0
        %863 = vmatpush1.bf16.msra.mxu0 0
        %864 = vmatprep.subr.bf16.mxu0 0
        %865 = vmatpush1.bf16.msra.mxu0 0
        %866 = vmatprep.subr.bf16.mxu0 0
        %867 = vmatpush1.bf16.msra.mxu0 0
        %868 = vmatprep.subr.bf16.mxu0 0
        %869 = vmatpush1.bf16.msra.mxu0 0
        %870 = vmatprep.subr.bf16.mxu0 0
        %871 = vmatpush1.bf16.msra.mxu0 0
        %872 = vmatprep.subr.bf16.mxu0 0
        %873 = vmatpush1.bf16.msra.mxu0 0
        %874 = vmatprep.subr.bf16.mxu0 0
        %875 = vmatpush1.bf16.msra.mxu0 0
        %876 = vmatprep.subr.bf16.mxu0 0
        %877 = vmatpush1.bf16.msra.mxu0 0
        %878 = vmatprep.subr.bf16.mxu0 0
        %879 = vmatpush1.bf16.msra.mxu0 0
        %880 = vmatprep.mubr.bf16.mxu0 0
        %881 = vmatmul.mubr.bf16.gmra.mrb[0].mxu0 %v834
        %v882 = vpop.f32.mrb[0].mxu0
        %v883 = vadd.f32 %v800, %v882
        %v884 = vpop.f32.mrb[0].mxu0
        %v885 = vadd.f32 %v804, %v884
        %v886 = vpop.f32.mrb[0].mxu0
        %v887 = vadd.f32 %v800, %v886
        %v888 = vpop.f32.mrb[0].mxu0
        %v889 = vadd.f32 %v804, %v888
        %890 = vmatprep.mubr.bf16.mxu0 0
        %891 = vmatmul.mubr.bf16.gmra.mrb[0].mxu0 %v837
        %v892 = vpop.f32.mrb[0].mxu0
        %v893 = vadd.f32 %v800, %v892
        %v894 = vpop.f32.mrb[0].mxu0
        %v895 = vadd.f32 %v804, %v894
        %v896 = vpop.f32.mrb[0].mxu0
        %v897 = vadd.f32 %v800, %v896
        %v898 = vpop.f32.mrb[0].mxu0
        %v899 = vadd.f32 %v804, %v898
        %900 = vdwg.mxu0
        %v901 = vmax.f32 %v883, 0.0
        %v902 = vmax.f32 %v885, 0.0
        %v903 = vmax.f32 %v887, 0.0
        %v904 = vmax.f32 %v889, 0.0
        %v905 = vmax.f32 %v893, 0.0
        %v906 = vmax.f32 %v895, 0.0
        %v907 = vmax.f32 %v897, 0.0
        %v908 = vmax.f32 %v899, 0.0
        %v909 = vpack.c.bf16 %v903, %v901
        %v910 = vpack.c.bf16 %v907, %v905
        %v911 = vld [vmem:[%s3] sm:$0xff]
        %v912 = vld [vmem:[%s3 + $0x8] sm:$0xff]
        %v913 = vld [vmem:[%s3 + $0x10] sm:$0xff]
        %v914 = vld [vmem:[%s3 + $0x18] sm:$0xff]
        %v915 = vld [vmem:[%s3 + $0x20] sm:$0xff]
        %v916 = vld [vmem:[%s3 + $0x28] sm:$0xff]
        %v917 = vld [vmem:[%s3 + $0x30] sm:$0xff]
        %v918 = vld [vmem:[%s3 + $0x38] sm:$0xff]
        %v919 = vld [vmem:[%s3 + $0x40] sm:$0xff]
        %v920 = vld [vmem:[%s3 + $0x48] sm:$0xff]
        %v921 = vld [vmem:[%s3 + $0x50] sm:$0xff]
        %v922 = vld [vmem:[%s3 + $0x58] sm:$0xff]
        %v923 = vld [vmem:[%s3 + $0x60] sm:$0xff]
        %v924 = vld [vmem:[%s3 + $0x68] sm:$0xff]
        %v925 = vld [vmem:[%s3 + $0x70] sm:$0xff]
        %v926 = vld [vmem:[%s3 + $0x78] sm:$0xff]
        %v927 = vld [vmem:[#allocation7] sm:$0x3]
        %v929 = vlaneseq
        %v930 = vshrl.u32 %v929, 7
        %v931 = vsub.s32 0, %v930
        %v932 = vrot.slane %v927, %v931
        %v933 = vlaneseq
        %v934 = vshrl.u32 %v933, 7
        %v935 = vsub.s32 1, %v934
        %v936 = vrot.slane %v927, %v935
        %v955 = vunpack.c.l.b16 %v911
        %v956 = vunpack.c.h.b16 %v911
        %v957 = vunpack.c.l.b16 %v912
        %v958 = vunpack.c.h.b16 %v912
        %v959 = vunpack.c.l.b16 %v913
        %v960 = vunpack.c.h.b16 %v913
        %v961 = vunpack.c.l.b16 %v914
        %v962 = vunpack.c.h.b16 %v914
        %v963 = vunpack.c.l.b16 %v915
        %v964 = vunpack.c.h.b16 %v915
        %v965 = vunpack.c.l.b16 %v916
        %v966 = vunpack.c.h.b16 %v916
        %v967 = vunpack.c.l.b16 %v917
        %v968 = vunpack.c.h.b16 %v917
        %v969 = vunpack.c.l.b16 %v918
        %v970 = vunpack.c.h.b16 %v918
        %v971 = vunpack.c.l.b16 %v919
        %v972 = vunpack.c.h.b16 %v919
        %v973 = vunpack.c.l.b16 %v920
        %v974 = vunpack.c.h.b16 %v920
        %v975 = vunpack.c.l.b16 %v921
        %v976 = vunpack.c.h.b16 %v921
        %v977 = vunpack.c.l.b16 %v922
        %v978 = vunpack.c.h.b16 %v922
        %v979 = vunpack.c.l.b16 %v923
        %v980 = vunpack.c.h.b16 %v923
        %v981 = vunpack.c.l.b16 %v924
        %v982 = vunpack.c.h.b16 %v924
        %v983 = vunpack.c.l.b16 %v925
        %v984 = vunpack.c.h.b16 %v925
        %v985 = vunpack.c.l.b16 %v926
        %v986 = vunpack.c.h.b16 %v926
        %v987 = vpack.c.b16 %v957, %v955
        %v988 = vpack.c.b16 %v958, %v956
        %v989 = vpack.c.b16 %v961, %v959
        %v990 = vpack.c.b16 %v962, %v960
        %v991 = vpack.c.b16 %v965, %v963
        %v992 = vpack.c.b16 %v966, %v964
        %v993 = vpack.c.b16 %v969, %v967
        %v994 = vpack.c.b16 %v970, %v968
        %v995 = vpack.c.b16 %v973, %v971
        %v996 = vpack.c.b16 %v974, %v972
        %v997 = vpack.c.b16 %v977, %v975
        %v998 = vpack.c.b16 %v978, %v976
        %v999 = vpack.c.b16 %v981, %v979
        %v1000 = vpack.c.b16 %v982, %v980
        %v1001 = vpack.c.b16 %v985, %v983
        %v1002 = vpack.c.b16 %v986, %v984
        %1019 = vmatprep.subr.bf16.mxu0 %v988
        %1020 = vmatpush1.bf16.msra.mxu0 %v987
        %1021 = vmatprep.subr.bf16.mxu0 %v990
        %1022 = vmatpush1.bf16.msra.mxu0 %v989
        %1023 = vmatprep.subr.bf16.mxu0 %v992
        %1024 = vmatpush1.bf16.msra.mxu0 %v991
        %1025 = vmatprep.subr.bf16.mxu0 %v994
        %1026 = vmatpush1.bf16.msra.mxu0 %v993
        %1027 = vmatprep.subr.bf16.mxu0 %v996
        %1028 = vmatpush1.bf16.msra.mxu0 %v995
        %1029 = vmatprep.subr.bf16.mxu0 %v998
        %1030 = vmatpush1.bf16.msra.mxu0 %v997
        %1031 = vmatprep.subr.bf16.mxu0 %v1000
        %1032 = vmatpush1.bf16.msra.mxu0 %v999
        %1033 = vmatprep.subr.bf16.mxu0 %v1002
        %1034 = vmatpush1.bf16.msra.mxu0 %v1001
        %1035 = vmatprep.subr.bf16.mxu0 0
        %1036 = vmatpush1.bf16.msra.mxu0 0
        %1037 = vmatprep.subr.bf16.mxu0 0
        %1038 = vmatpush1.bf16.msra.mxu0 0
        %1039 = vmatprep.subr.bf16.mxu0 0
        %1040 = vmatpush1.bf16.msra.mxu0 0
        %1041 = vmatprep.subr.bf16.mxu0 0
        %1042 = vmatpush1.bf16.msra.mxu0 0
        %1043 = vmatprep.subr.bf16.mxu0 0
        %1044 = vmatpush1.bf16.msra.mxu0 0
        %1045 = vmatprep.subr.bf16.mxu0 0
        %1046 = vmatpush1.bf16.msra.mxu0 0
        %1047 = vmatprep.subr.bf16.mxu0 0
        %1048 = vmatpush1.bf16.msra.mxu0 0
        %1049 = vmatprep.subr.bf16.mxu0 0
        %1050 = vmatpush1.bf16.msra.mxu0 0
        %1051 = vmatprep.mubr.bf16.mxu0 0
        %1052 = vmatmul.mubr.bf16.gmra.mrb[0].mxu0 %v909
        %v1053 = vpop.f32.mrb[0].mxu0
        %v1054 = vadd.f32 %v932, %v1053
        %v1055 = vpop.f32.mrb[0].mxu0
        %v1056 = vadd.f32 %v936, %v1055
        %v1057 = vpop.f32.mrb[0].mxu0
        %v1058 = vadd.f32 %v932, %v1057
        %v1059 = vpop.f32.mrb[0].mxu0
        %v1060 = vadd.f32 %v936, %v1059
        %1061 = vmatprep.mubr.bf16.mxu0 0
        %1062 = vmatmul.mubr.bf16.gmra.mrb[0].mxu0 %v910
        %v1063 = vpop.f32.mrb[0].mxu0
        %v1064 = vadd.f32 %v932, %v1063
        %v1065 = vpop.f32.mrb[0].mxu0
        %v1066 = vadd.f32 %v936, %v1065
        %v1067 = vpop.f32.mrb[0].mxu0
        %v1068 = vadd.f32 %v932, %v1067
        %v1069 = vpop.f32.mrb[0].mxu0
        %v1070 = vadd.f32 %v936, %v1069
        %1071 = vdwg.mxu0
        %v1072 = vmul.f32 %v1054, 0.01
        %v1073 = vmul.f32 %v1056, 0.01
        %v1074 = vmul.f32 %v1058, 0.01
        %v1075 = vmul.f32 %v1060, 0.01
        %v1076 = vmul.f32 %v1064, 0.01
        %v1077 = vmul.f32 %v1066, 0.01
        %v1078 = vmul.f32 %v1068, 0.01
        %v1079 = vmul.f32 %v1070, 0.01
        %v1080 = vmax.f32 %v1054, %v1072
        %v1081 = vmax.f32 %v1056, %v1073
        %v1082 = vmax.f32 %v1058, %v1074
        %v1083 = vmax.f32 %v1060, %v1075
        %v1084 = vmax.f32 %v1064, %v1076
        %v1085 = vmax.f32 %v1066, %v1077
        %v1086 = vmax.f32 %v1068, %v1078
        %v1087 = vmax.f32 %v1070, %v1079
        %v1088 = vpack.c.bf16 %v1082, %v1080
        %v1089 = vpack.c.bf16 %v1083, %v1081
        %v1090 = vpack.c.bf16 %v1086, %v1084
        %v1091 = vpack.c.bf16 %v1087, %v1085
        %v1092 = vld [vmem:[%s5] sm:$0xf]
        %v1093 = vld [vmem:[%s5 + $0x4] sm:$0xf]
        %v1094 = vld [vmem:[%s5 + $0x8] sm:$0xf]
        %v1095 = vld [vmem:[%s5 + $0xc] sm:$0xf]
        %v1096 = vld [vmem:[%s5 + $0x10] sm:$0xf]
        %v1097 = vld [vmem:[%s5 + $0x14] sm:$0xf]
        %v1098 = vld [vmem:[%s5 + $0x18] sm:$0xf]
        %v1099 = vld [vmem:[%s5 + $0x1c] sm:$0xf]
        %v1100 = vld [vmem:[%s5 + $0x20] sm:$0xf]
        %v1101 = vld [vmem:[%s5 + $0x24] sm:$0xf]
        %v1102 = vld [vmem:[%s5 + $0x28] sm:$0xf]
        %v1103 = vld [vmem:[%s5 + $0x2c] sm:$0xf]
        %v1104 = vld [vmem:[%s5 + $0x30] sm:$0xf]
        %v1105 = vld [vmem:[%s5 + $0x34] sm:$0xf]
        %v1106 = vld [vmem:[%s5 + $0x38] sm:$0xf]
        %v1107 = vld [vmem:[%s5 + $0x3c] sm:$0xf]
        %v1108 = vld [vmem:[%s5 + $0x40] sm:$0xf]
        %v1109 = vld [vmem:[%s5 + $0x44] sm:$0xf]
        %v1110 = vld [vmem:[%s5 + $0x48] sm:$0xf]
        %v1111 = vld [vmem:[%s5 + $0x4c] sm:$0xf]
        %v1112 = vld [vmem:[%s5 + $0x50] sm:$0xf]
        %v1113 = vld [vmem:[%s5 + $0x54] sm:$0xf]
        %v1114 = vld [vmem:[%s5 + $0x58] sm:$0xf]
        %v1115 = vld [vmem:[%s5 + $0x5c] sm:$0xf]
        %v1116 = vld [vmem:[%s5 + $0x60] sm:$0xf]
        %v1117 = vld [vmem:[%s5 + $0x64] sm:$0xf]
        %v1118 = vld [vmem:[%s5 + $0x68] sm:$0xf]
        %v1119 = vld [vmem:[%s5 + $0x6c] sm:$0xf]
        %v1120 = vld [vmem:[%s5 + $0x70] sm:$0xf]
        %v1121 = vld [vmem:[%s5 + $0x74] sm:$0xf]
        %v1122 = vld [vmem:[%s5 + $0x78] sm:$0xf]
        %v1123 = vld [vmem:[%s5 + $0x7c] sm:$0xf]
        %v1124 = vld [vmem:[%s6] sm:$0x1]
        %v1126 = vlaneseq
        %v1127 = vshrl.u32 %v1126, 7
        %v1128 = vsub.s32 0, %v1127
        %v1129 = vrot.slane %v1124, %v1128
        %v1163 = vunpack.c.l.b16 %v1092
        %v1164 = vunpack.c.l.b16 %v1093
        %v1165 = vunpack.c.l.b16 %v1094
        %v1166 = vunpack.c.l.b16 %v1095
        %v1167 = vunpack.c.l.b16 %v1096
        %v1168 = vunpack.c.l.b16 %v1097
        %v1169 = vunpack.c.l.b16 %v1098
        %v1170 = vunpack.c.l.b16 %v1099
        %v1171 = vunpack.c.l.b16 %v1100
        %v1172 = vunpack.c.l.b16 %v1101
        %v1173 = vunpack.c.l.b16 %v1102
        %v1174 = vunpack.c.l.b16 %v1103
        %v1175 = vunpack.c.l.b16 %v1104
        %v1176 = vunpack.c.l.b16 %v1105
        %v1177 = vunpack.c.l.b16 %v1106
        %v1178 = vunpack.c.l.b16 %v1107
        %v1179 = vunpack.c.l.b16 %v1108
        %v1180 = vunpack.c.l.b16 %v1109
        %v1181 = vunpack.c.l.b16 %v1110
        %v1182 = vunpack.c.l.b16 %v1111
        %v1183 = vunpack.c.l.b16 %v1112
        %v1184 = vunpack.c.l.b16 %v1113
        %v1185 = vunpack.c.l.b16 %v1114
        %v1186 = vunpack.c.l.b16 %v1115
        %v1187 = vunpack.c.l.b16 %v1116
        %v1188 = vunpack.c.l.b16 %v1117
        %v1189 = vunpack.c.l.b16 %v1118
        %v1190 = vunpack.c.l.b16 %v1119
        %v1191 = vunpack.c.l.b16 %v1120
        %v1192 = vunpack.c.l.b16 %v1121
        %v1193 = vunpack.c.l.b16 %v1122
        %v1194 = vunpack.c.l.b16 %v1123
        %v1195 = vpack.c.b16 %v1164, %v1163
        %v1196 = vpack.c.b16 %v1166, %v1165
        %v1197 = vpack.c.b16 %v1168, %v1167
        %v1198 = vpack.c.b16 %v1170, %v1169
        %v1199 = vpack.c.b16 %v1172, %v1171
        %v1200 = vpack.c.b16 %v1174, %v1173
        %v1201 = vpack.c.b16 %v1176, %v1175
        %v1202 = vpack.c.b16 %v1178, %v1177
        %v1203 = vpack.c.b16 %v1180, %v1179
        %v1204 = vpack.c.b16 %v1182, %v1181
        %v1205 = vpack.c.b16 %v1184, %v1183
        %v1206 = vpack.c.b16 %v1186, %v1185
        %v1207 = vpack.c.b16 %v1188, %v1187
        %v1208 = vpack.c.b16 %v1190, %v1189
        %v1209 = vpack.c.b16 %v1192, %v1191
        %v1210 = vpack.c.b16 %v1194, %v1193
        %1227 = vmatprep.subr.bf16.mxu0 0
        %1228 = vmatpush1.bf16.msra.mxu0 %v1195
        %1229 = vmatprep.subr.bf16.mxu0 0
        %1230 = vmatpush1.bf16.msra.mxu0 %v1196
        %1231 = vmatprep.subr.bf16.mxu0 0
        %1232 = vmatpush1.bf16.msra.mxu0 %v1197
        %1233 = vmatprep.subr.bf16.mxu0 0
        %1234 = vmatpush1.bf16.msra.mxu0 %v1198
        %1235 = vmatprep.subr.bf16.mxu0 0
        %1236 = vmatpush1.bf16.msra.mxu0 %v1199
        %1237 = vmatprep.subr.bf16.mxu0 0
        %1238 = vmatpush1.bf16.msra.mxu0 %v1200
        %1239 = vmatprep.subr.bf16.mxu0 0
        %1240 = vmatpush1.bf16.msra.mxu0 %v1201
        %1241 = vmatprep.subr.bf16.mxu0 0
        %1242 = vmatpush1.bf16.msra.mxu0 %v1202
        %1243 = vmatprep.subr.bf16.mxu0 0
        %1244 = vmatpush1.bf16.msra.mxu0 %v1203
        %1245 = vmatprep.subr.bf16.mxu0 0
        %1246 = vmatpush1.bf16.msra.mxu0 %v1204
        %1247 = vmatprep.subr.bf16.mxu0 0
        %1248 = vmatpush1.bf16.msra.mxu0 %v1205
        %1249 = vmatprep.subr.bf16.mxu0 0
        %1250 = vmatpush1.bf16.msra.mxu0 %v1206
        %1251 = vmatprep.subr.bf16.mxu0 0
        %1252 = vmatpush1.bf16.msra.mxu0 %v1207
        %1253 = vmatprep.subr.bf16.mxu0 0
        %1254 = vmatpush1.bf16.msra.mxu0 %v1208
        %1255 = vmatprep.subr.bf16.mxu0 0
        %1256 = vmatpush1.bf16.msra.mxu0 %v1209
        %1257 = vmatprep.subr.bf16.mxu0 0
        %1258 = vmatpush1.bf16.msra.mxu0 %v1210
        %1259 = vmatprep.mubr.bf16.mxu0 %v1089
        %1260 = vmatmul.mubr.bf16.gmra.mrb[0].mxu0 %v1088
        %v1261 = vpop.f32.mrb[0].mxu0
        %v1262 = vadd.f32 %v1129, %v1261
        %v1263 = vpop.f32.mrb[0].mxu0
        %v1264 = vpop.f32.mrb[0].mxu0
        %v1265 = vadd.f32 %v1129, %v1264
        %v1266 = vpop.f32.mrb[0].mxu0
        %1267 = vmatprep.mubr.bf16.mxu0 %v1091
        %1268 = vmatmul.mubr.bf16.gmra.mrb[0].mxu0 %v1090
        %v1269 = vpop.f32.mrb[0].mxu0
        %v1270 = vadd.f32 %v1129, %v1269
        %v1271 = vpop.f32.mrb[0].mxu0
        %v1272 = vpop.f32.mrb[0].mxu0
        %v1273 = vadd.f32 %v1129, %v1272
        %v1274 = vpop.f32.mrb[0].mxu0
        %1275 = vdwg.mxu0
        %v1276 = vmul.f32 %v1262, 0.01
        %v1277 = vmul.f32 %v1265, 0.01
        %v1278 = vmul.f32 %v1270, 0.01
        %v1279 = vmul.f32 %v1273, 0.01
        %v1280 = vmax.f32 %v1262, %v1276
        %v1281 = vmax.f32 %v1265, %v1277
        %v1282 = vmax.f32 %v1270, %v1278
        %v1283 = vmax.f32 %v1273, %v1279
        %v1284 = vpack.c.bf16 %v1281, %v1280
        %v1285 = vpack.c.bf16 %v1283, %v1282
        %v1286 = vld [vmem:[%s7] sm:$0xf]
        %v1287 = vld [vmem:[%s7 + $0x4] sm:$0xf]
        %v1288 = vld [vmem:[%s7 + $0x8] sm:$0xf]
        %v1289 = vld [vmem:[%s7 + $0xc] sm:$0xf]
        %v1290 = vld [vmem:[%s7 + $0x10] sm:$0xf]
        %v1291 = vld [vmem:[%s7 + $0x14] sm:$0xf]
        %v1292 = vld [vmem:[%s7 + $0x18] sm:$0xf]
        %v1293 = vld [vmem:[%s7 + $0x1c] sm:$0xf]
        %v1294 = vld [vmem:[%s7 + $0x20] sm:$0xf]
        %v1295 = vld [vmem:[%s7 + $0x24] sm:$0xf]
        %v1296 = vld [vmem:[%s7 + $0x28] sm:$0xf]
        %v1297 = vld [vmem:[%s7 + $0x2c] sm:$0xf]
        %v1298 = vld [vmem:[%s7 + $0x30] sm:$0xf]
        %v1299 = vld [vmem:[%s7 + $0x34] sm:$0xf]
        %v1300 = vld [vmem:[%s7 + $0x38] sm:$0xf]
        %v1301 = vld [vmem:[%s7 + $0x3c] sm:$0xf]
        %v1302 = vld [vmem:[%s8] sm:$0x1]
        %v1304 = vlaneseq
        %v1305 = vshrl.u32 %v1304, 7
        %v1306 = vsub.s32 0, %v1305
        %v1307 = vrot.slane %v1302, %v1306
        %v1325 = vunpack.c.l.b16 %v1286
        %v1326 = vunpack.c.l.b16 %v1287
        %v1327 = vunpack.c.l.b16 %v1288
        %v1328 = vunpack.c.l.b16 %v1289
        %v1329 = vunpack.c.l.b16 %v1290
        %v1330 = vunpack.c.l.b16 %v1291
        %v1331 = vunpack.c.l.b16 %v1292
        %v1332 = vunpack.c.l.b16 %v1293
        %v1333 = vunpack.c.l.b16 %v1294
        %v1334 = vunpack.c.l.b16 %v1295
        %v1335 = vunpack.c.l.b16 %v1296
        %v1336 = vunpack.c.l.b16 %v1297
        %v1337 = vunpack.c.l.b16 %v1298
        %v1338 = vunpack.c.l.b16 %v1299
        %v1339 = vunpack.c.l.b16 %v1300
        %v1340 = vunpack.c.l.b16 %v1301
        %v1341 = vpack.c.b16 %v1326, %v1325
        %v1342 = vpack.c.b16 %v1328, %v1327
        %v1343 = vpack.c.b16 %v1330, %v1329
        %v1344 = vpack.c.b16 %v1332, %v1331
        %v1345 = vpack.c.b16 %v1334, %v1333
        %v1346 = vpack.c.b16 %v1336, %v1335
        %v1347 = vpack.c.b16 %v1338, %v1337
        %v1348 = vpack.c.b16 %v1340, %v1339
        %1357 = vmatprep.subr.bf16.mxu0 0
        %1358 = vmatpush1.bf16.msra.mxu0 %v1341
        %1359 = vmatprep.subr.bf16.mxu0 0
        %1360 = vmatpush1.bf16.msra.mxu0 %v1342
        %1361 = vmatprep.subr.bf16.mxu0 0
        %1362 = vmatpush1.bf16.msra.mxu0 %v1343
        %1363 = vmatprep.subr.bf16.mxu0 0
        %1364 = vmatpush1.bf16.msra.mxu0 %v1344
        %1365 = vmatprep.subr.bf16.mxu0 0
        %1366 = vmatpush1.bf16.msra.mxu0 %v1345
        %1367 = vmatprep.subr.bf16.mxu0 0
        %1368 = vmatpush1.bf16.msra.mxu0 %v1346
        %1369 = vmatprep.subr.bf16.mxu0 0
        %1370 = vmatpush1.bf16.msra.mxu0 %v1347
        %1371 = vmatprep.subr.bf16.mxu0 0
        %1372 = vmatpush1.bf16.msra.mxu0 %v1348
        %1373 = vmatprep.subr.bf16.mxu0 0
        %1374 = vmatpush1.bf16.msra.mxu0 0
        %1375 = vmatprep.subr.bf16.mxu0 0
        %1376 = vmatpush1.bf16.msra.mxu0 0
        %1377 = vmatprep.subr.bf16.mxu0 0
        %1378 = vmatpush1.bf16.msra.mxu0 0
        %1379 = vmatprep.subr.bf16.mxu0 0
        %1380 = vmatpush1.bf16.msra.mxu0 0
        %1381 = vmatprep.subr.bf16.mxu0 0
        %1382 = vmatpush1.bf16.msra.mxu0 0
        %1383 = vmatprep.subr.bf16.mxu0 0
        %1384 = vmatpush1.bf16.msra.mxu0 0
        %1385 = vmatprep.subr.bf16.mxu0 0
        %1386 = vmatpush1.bf16.msra.mxu0 0
        %1387 = vmatprep.subr.bf16.mxu0 0
        %1388 = vmatpush1.bf16.msra.mxu0 0
        %1389 = vmatprep.mubr.bf16.mxu0 0
        %1390 = vmatmul.mubr.bf16.gmra.mrb[0].mxu0 %v1284
        %v1391 = vpop.f32.mrb[0].mxu0
        %v1392 = vadd.f32 %v1307, %v1391
        %v1393 = vpop.f32.mrb[0].mxu0
        %v1394 = vpop.f32.mrb[0].mxu0
        %v1395 = vadd.f32 %v1307, %v1394
        %v1396 = vpop.f32.mrb[0].mxu0
        %1397 = vmatprep.mubr.bf16.mxu0 0
        %1398 = vmatmul.mubr.bf16.gmra.mrb[0].mxu0 %v1285
        %v1399 = vpop.f32.mrb[0].mxu0
        %v1400 = vadd.f32 %v1307, %v1399
        %v1401 = vpop.f32.mrb[0].mxu0
        %v1402 = vpop.f32.mrb[0].mxu0
        %v1403 = vadd.f32 %v1307, %v1402
        %v1404 = vpop.f32.mrb[0].mxu0
        %1405 = vdwg.mxu0
        %vm1406 = vcmask 31744
        %v1407 = vsel %vm1406, %v1392, -inf
        %1408 = vmax.xlane.f32.xlu0 %v1407
        %v1409 = vpop.xlane.xlu0 %1408
        %v1410 = vsel %vm1406, %v1395, -inf
        %1411 = vmax.xlane.f32.xlu0 %v1410
        %v1412 = vpop.xlane.xlu0 %1411
        %v1413 = vsel %vm1406, %v1400, -inf
        %1414 = vmax.xlane.f32.xlu0 %v1413
        %v1415 = vpop.xlane.xlu0 %1414
        %v1416 = vsel %vm1406, %v1403, -inf
        %1417 = vmax.xlane.f32.xlu0 %v1416
        %v1418 = vpop.xlane.xlu0 %1417
        %v1419 = vsub.f32 %v1392, %v1409
        %v1420 = vsub.f32 %v1395, %v1412
        %v1421 = vsub.f32 %v1400, %v1415
        %v1422 = vsub.f32 %v1403, %v1418
        %v1423 = vmul.f32 %v1419, 1.442695
        %v1424 = vpow.pop %v1423
        %v1425 = vmul.f32 %v1420, 1.442695
        %v1426 = vpow.pop %v1425
        %v1427 = vmul.f32 %v1421, 1.442695
        %v1428 = vpow.pop %v1427
        %v1429 = vmul.f32 %v1422, 1.442695
        %v1430 = vpow.pop %v1429
        %v1431 = vsel %vm1406, %v1424, 0.0
        %1432 = vadd.xlane.f32.xlu0 %v1431
        %v1433 = vpop.xlane.xlu0 %1432
        %v1434 = vsel %vm1406, %v1426, 0.0
        %1435 = vadd.xlane.f32.xlu0 %v1434
        %v1436 = vpop.xlane.xlu0 %1435
        %v1437 = vsel %vm1406, %v1428, 0.0
        %1438 = vadd.xlane.f32.xlu0 %v1437
        %v1439 = vpop.xlane.xlu0 %1438
        %v1440 = vsel %vm1406, %v1430, 0.0
        %1441 = vadd.xlane.f32.xlu0 %v1440
        %v1442 = vpop.xlane.xlu0 %1441
        %v1443 = vrcp.pop %v1433
        %v1444 = vmul.f32 %v1424, %v1443
        %v1445 = vrcp.pop %v1436
        %v1446 = vmul.f32 %v1426, %v1445
        %v1447 = vrcp.pop %v1439
        %v1448 = vmul.f32 %v1428, %v1447
        %v1449 = vrcp.pop %v1442
        %v1450 = vmul.f32 %v1430, %v1449
        %v1451 = vpack.c.bf16 %v904, %v902
        %v1452 = vpack.c.bf16 %v908, %v906
        %v1453 = vld [vmem:[%s9] sm:$0xf]
        %v1454 = vld [vmem:[%s9 + $0x4] sm:$0xf]
        %v1455 = vld [vmem:[%s9 + $0x8] sm:$0xf]
        %v1456 = vld [vmem:[%s9 + $0xc] sm:$0xf]
        %v1457 = vld [vmem:[%s9 + $0x10] sm:$0xf]
        %v1458 = vld [vmem:[%s9 + $0x14] sm:$0xf]
        %v1459 = vld [vmem:[%s9 + $0x18] sm:$0xf]
        %v1460 = vld [vmem:[%s9 + $0x1c] sm:$0xf]
        %v1461 = vld [vmem:[%s9 + $0x20] sm:$0xf]
        %v1462 = vld [vmem:[%s9 + $0x24] sm:$0xf]
        %v1463 = vld [vmem:[%s9 + $0x28] sm:$0xf]
        %v1464 = vld [vmem:[%s9 + $0x2c] sm:$0xf]
        %v1465 = vld [vmem:[%s9 + $0x30] sm:$0xf]
        %v1466 = vld [vmem:[%s9 + $0x34] sm:$0xf]
        %v1467 = vld [vmem:[%s9 + $0x38] sm:$0xf]
        %v1468 = vld [vmem:[%s9 + $0x3c] sm:$0xf]
        %v1469 = vld [vmem:[%s10] sm:$0x1]
        %v1471 = vlaneseq
        %v1472 = vshrl.u32 %v1471, 7
        %v1473 = vsub.s32 0, %v1472
        %v1474 = vrot.slane %v1469, %v1473
        %v1492 = vunpack.c.l.b16 %v1453
        %v1493 = vunpack.c.l.b16 %v1454
        %v1494 = vunpack.c.l.b16 %v1455
        %v1495 = vunpack.c.l.b16 %v1456
        %v1496 = vunpack.c.l.b16 %v1457
        %v1497 = vunpack.c.l.b16 %v1458
        %v1498 = vunpack.c.l.b16 %v1459
        %v1499 = vunpack.c.l.b16 %v1460
        %v1500 = vunpack.c.l.b16 %v1461
        %v1501 = vunpack.c.l.b16 %v1462
        %v1502 = vunpack.c.l.b16 %v1463
        %v1503 = vunpack.c.l.b16 %v1464
        %v1504 = vunpack.c.l.b16 %v1465
        %v1505 = vunpack.c.l.b16 %v1466
        %v1506 = vunpack.c.l.b16 %v1467
        %v1507 = vunpack.c.l.b16 %v1468
        %v1508 = vpack.c.b16 %v1493, %v1492
        %v1509 = vpack.c.b16 %v1495, %v1494
        %v1510 = vpack.c.b16 %v1497, %v1496
        %v1511 = vpack.c.b16 %v1499, %v1498
        %v1512 = vpack.c.b16 %v1501, %v1500
        %v1513 = vpack.c.b16 %v1503, %v1502
        %v1514 = vpack.c.b16 %v1505, %v1504
        %v1515 = vpack.c.b16 %v1507, %v1506
        %1524 = vmatprep.subr.bf16.mxu0 0
        %1525 = vmatpush1.bf16.msra.mxu0 %v1508
        %1526 = vmatprep.subr.bf16.mxu0 0
        %1527 = vmatpush1.bf16.msra.mxu0 %v1509
        %1528 = vmatprep.subr.bf16.mxu0 0
        %1529 = vmatpush1.bf16.msra.mxu0 %v1510
        %1530 = vmatprep.subr.bf16.mxu0 0
        %1531 = vmatpush1.bf16.msra.mxu0 %v1511
        %1532 = vmatprep.subr.bf16.mxu0 0
        %1533 = vmatpush1.bf16.msra.mxu0 %v1512
        %1534 = vmatprep.subr.bf16.mxu0 0
        %1535 = vmatpush1.bf16.msra.mxu0 %v1513
        %1536 = vmatprep.subr.bf16.mxu0 0
        %1537 = vmatpush1.bf16.msra.mxu0 %v1514
        %1538 = vmatprep.subr.bf16.mxu0 0
        %1539 = vmatpush1.bf16.msra.mxu0 %v1515
        %1540 = vmatprep.subr.bf16.mxu0 0
        %1541 = vmatpush1.bf16.msra.mxu0 0
        %1542 = vmatprep.subr.bf16.mxu0 0
        %1543 = vmatpush1.bf16.msra.mxu0 0
        %1544 = vmatprep.subr.bf16.mxu0 0
        %1545 = vmatpush1.bf16.msra.mxu0 0
        %1546 = vmatprep.subr.bf16.mxu0 0
        %1547 = vmatpush1.bf16.msra.mxu0 0
        %1548 = vmatprep.subr.bf16.mxu0 0
        %1549 = vmatpush1.bf16.msra.mxu0 0
        %1550 = vmatprep.subr.bf16.mxu0 0
        %1551 = vmatpush1.bf16.msra.mxu0 0
        %1552 = vmatprep.subr.bf16.mxu0 0
        %1553 = vmatpush1.bf16.msra.mxu0 0
        %1554 = vmatprep.subr.bf16.mxu0 0
        %1555 = vmatpush1.bf16.msra.mxu0 0
        %1556 = vmatprep.mubr.bf16.mxu0 0
        %1557 = vmatmul.mubr.bf16.gmra.mrb[0].mxu0 %v1451
        %v1558 = vpop.f32.mrb[0].mxu0
        %v1559 = vadd.f32 %v1474, %v1558
        %v1560 = vpop.f32.mrb[0].mxu0
        %v1561 = vpop.f32.mrb[0].mxu0
        %v1562 = vadd.f32 %v1474, %v1561
        %v1563 = vpop.f32.mrb[0].mxu0
        %1564 = vmatprep.mubr.bf16.mxu0 0
        %1565 = vmatmul.mubr.bf16.gmra.mrb[0].mxu0 %v1452
        %v1566 = vpop.f32.mrb[0].mxu0
        %v1567 = vadd.f32 %v1474, %v1566
        %v1568 = vpop.f32.mrb[0].mxu0
        %v1569 = vpop.f32.mrb[0].mxu0
        %v1570 = vadd.f32 %v1474, %v1569
        %v1571 = vpop.f32.mrb[0].mxu0
        %1572 = vdwg.mxu0
        %vm1573 = vcmask 130048
        %v1574 = vsel %vm1573, %v1559, -inf
        %1575 = vmax.xlane.f32.xlu0 %v1574
        %v1576 = vpop.xlane.xlu0 %1575
        %v1577 = vsel %vm1573, %v1562, -inf
        %1578 = vmax.xlane.f32.xlu0 %v1577
        %v1579 = vpop.xlane.xlu0 %1578
        %v1580 = vsel %vm1573, %v1567, -inf
        %1581 = vmax.xlane.f32.xlu0 %v1580
        %v1582 = vpop.xlane.xlu0 %1581
        %v1583 = vsel %vm1573, %v1570, -inf
        %1584 = vmax.xlane.f32.xlu0 %v1583
        %v1585 = vpop.xlane.xlu0 %1584
        %v1586 = vsub.f32 %v1559, %v1576
        %v1587 = vsub.f32 %v1562, %v1579
        %v1588 = vsub.f32 %v1567, %v1582
        %v1589 = vsub.f32 %v1570, %v1585
        %v1590 = vmul.f32 %v1586, 1.442695
        %v1591 = vpow.pop %v1590
        %v1592 = vmul.f32 %v1587, 1.442695
        %v1593 = vpow.pop %v1592
        %v1594 = vmul.f32 %v1588, 1.442695
        %v1595 = vpow.pop %v1594
        %v1596 = vmul.f32 %v1589, 1.442695
        %v1597 = vpow.pop %v1596
        %v1598 = vpack.c.bf16 %v1593, %v1591
        %v1599 = vpack.c.bf16 %v1597, %v1595
        %v1600 = vld [vmem:[%s11] sm:$0xf]
        %v1601 = vld [vmem:[%s11 + $0x4] sm:$0xf]
        %v1604 = vunpack.c.l.b16 %v1600
        %v1605 = vunpack.c.l.b16 %v1601
        %v1606 = vpack.c.b16 %v1605, %v1604
        %v1609 = vsel %vm1573, %v1598, 0
        %v1612 = vsel %vm1573, %v1599, 0
        %1614 = vmatprep.subr.bf16.mxu0 0
        %1615 = vmatpush1.bf16.msra.mxu0 %v1606
        %1616 = vmatprep.subr.bf16.mxu0 0
        %1617 = vmatpush1.bf16.msra.mxu0 0
        %1618 = vmatprep.subr.bf16.mxu0 0
        %1619 = vmatpush1.bf16.msra.mxu0 0
        %1620 = vmatprep.subr.bf16.mxu0 0
        %1621 = vmatpush1.bf16.msra.mxu0 0
        %1622 = vmatprep.subr.bf16.mxu0 0
        %1623 = vmatpush1.bf16.msra.mxu0 0
        %1624 = vmatprep.subr.bf16.mxu0 0
        %1625 = vmatpush1.bf16.msra.mxu0 0
        %1626 = vmatprep.subr.bf16.mxu0 0
        %1627 = vmatpush1.bf16.msra.mxu0 0
        %1628 = vmatprep.subr.bf16.mxu0 0
        %1629 = vmatpush1.bf16.msra.mxu0 0
        %1630 = vmatprep.subr.bf16.mxu0 0
        %1631 = vmatpush1.bf16.msra.mxu0 0
        %1632 = vmatprep.subr.bf16.mxu0 0
        %1633 = vmatpush1.bf16.msra.mxu0 0
        %1634 = vmatprep.subr.bf16.mxu0 0
        %1635 = vmatpush1.bf16.msra.mxu0 0
        %1636 = vmatprep.subr.bf16.mxu0 0
        %1637 = vmatpush1.bf16.msra.mxu0 0
        %1638 = vmatprep.subr.bf16.mxu0 0
        %1639 = vmatpush1.bf16.msra.mxu0 0
        %1640 = vmatprep.subr.bf16.mxu0 0
        %1641 = vmatpush1.bf16.msra.mxu0 0
        %1642 = vmatprep.subr.bf16.mxu0 0
        %1643 = vmatpush1.bf16.msra.mxu0 0
        %1644 = vmatprep.subr.bf16.mxu0 0
        %1645 = vmatpush1.bf16.msra.mxu0 0
        %1646 = vmatprep.mubr.bf16.mxu0 0
        %1647 = vmatmul.mubr.bf16.gmra.mrb[0].mxu0 %v1609
        %v1648 = vpop.f32.mrb[0].mxu0
        %v1649 = vadd.f32 0.0, %v1648
        %v1650 = vpop.f32.mrb[0].mxu0
        %v1651 = vpop.f32.mrb[0].mxu0
        %v1652 = vadd.f32 0.0, %v1651
        %v1653 = vpop.f32.mrb[0].mxu0
        %1654 = vmatprep.mubr.bf16.mxu0 0
        %1655 = vmatmul.mubr.bf16.gmra.mrb[0].mxu0 %v1612
        %v1656 = vpop.f32.mrb[0].mxu0
        %v1657 = vadd.f32 0.0, %v1656
        %v1658 = vpop.f32.mrb[0].mxu0
        %v1659 = vpop.f32.mrb[0].mxu0
        %v1660 = vadd.f32 0.0, %v1659
        %v1661 = vpop.f32.mrb[0].mxu0
        %1662 = vdwg.mxu0
        %v1663 = vpack.c.bf16 %v1446, %v1444
        %v1664 = vpack.c.bf16 %v1450, %v1448
        %v1665 = vld [vmem:[%s12] sm:$0x3]
        %v1667 = vsel %vm1406, %v1663, 0
        %v1670 = vsel %vm1406, %v1664, 0
        %vm1672 = vcmask 1041408
        %v1674 = vsel %vm1672, %v1665, 0
        %1676 = vmatprep.subr.bf16.mxu0 0
        %1677 = vmatpush1.bf16.msra.mxu0 %v1674
        %1678 = vmatprep.subr.bf16.mxu0 0
        %1679 = vmatpush1.bf16.msra.mxu0 0
        %1680 = vmatprep.subr.bf16.mxu0 0
        %1681 = vmatpush1.bf16.msra.mxu0 0
        %1682 = vmatprep.subr.bf16.mxu0 0
        %1683 = vmatpush1.bf16.msra.mxu0 0
        %1684 = vmatprep.subr.bf16.mxu0 0
        %1685 = vmatpush1.bf16.msra.mxu0 0
        %1686 = vmatprep.subr.bf16.mxu0 0
        %1687 = vmatpush1.bf16.msra.mxu0 0
        %1688 = vmatprep.subr.bf16.mxu0 0
        %1689 = vmatpush1.bf16.msra.mxu0 0
        %1690 = vmatprep.subr.bf16.mxu0 0
        %1691 = vmatpush1.bf16.msra.mxu0 0
        %1692 = vmatprep.subr.bf16.mxu0 0
        %1693 = vmatpush1.bf16.msra.mxu0 0
        %1694 = vmatprep.subr.bf16.mxu0 0
        %1695 = vmatpush1.bf16.msra.mxu0 0
        %1696 = vmatprep.subr.bf16.mxu0 0
        %1697 = vmatpush1.bf16.msra.mxu0 0
        %1698 = vmatprep.subr.bf16.mxu0 0
        %1699 = vmatpush1.bf16.msra.mxu0 0
        %1700 = vmatprep.subr.bf16.mxu0 0
        %1701 = vmatpush1.bf16.msra.mxu0 0
        %1702 = vmatprep.subr.bf16.mxu0 0
        %1703 = vmatpush1.bf16.msra.mxu0 0
        %1704 = vmatprep.subr.bf16.mxu0 0
        %1705 = vmatpush1.bf16.msra.mxu0 0
        %1706 = vmatprep.subr.bf16.mxu0 0
        %1707 = vmatpush1.bf16.msra.mxu0 0
        %1708 = vmatprep.mubr.bf16.mxu0 0
        %1709 = vmatmul.mubr.bf16.gmra.mrb[0].mxu0 %v1667
        %v1710 = vpop.f32.mrb[0].mxu0
        %v1711 = vadd.f32 0.0, %v1710
        %v1712 = vpop.f32.mrb[0].mxu0
        %v1713 = vpop.f32.mrb[0].mxu0
        %v1714 = vadd.f32 0.0, %v1713
        %v1715 = vpop.f32.mrb[0].mxu0
        %1716 = vmatprep.mubr.bf16.mxu0 0
        %1717 = vmatmul.mubr.bf16.gmra.mrb[0].mxu0 %v1670
        %v1718 = vpop.f32.mrb[0].mxu0
        %v1719 = vadd.f32 0.0, %v1718
        %v1720 = vpop.f32.mrb[0].mxu0
        %v1721 = vpop.f32.mrb[0].mxu0
        %v1722 = vadd.f32 0.0, %v1721
        %v1723 = vpop.f32.mrb[0].mxu0
        %1724 = vdwg.mxu0
        %v1725 = vmul.f32 %v1591, %v1711
        %v1726 = vmul.f32 %v1593, %v1714
        %v1727 = vmul.f32 %v1595, %v1719
        %v1728 = vmul.f32 %v1597, %v1722
        %v1729 = vrcp.pop %v1649
        %v1730 = vrcp.pop %v1652
        %v1731 = vrcp.pop %v1657
        %v1732 = vrcp.pop %v1660
        %v1733 = vmul.f32 %v1725, %v1729
        %v1734 = vmul.f32 %v1726, %v1730
        %v1735 = vmul.f32 %v1727, %v1731
        %v1736 = vmul.f32 %v1728, %v1732
        %v1737 = vpack.c.bf16 %v1734, %v1733
        %v1738 = vpack.c.bf16 %v1736, %v1735
        %v1739 = vld [vmem:[%s13] sm:$0xf]
        %v1740 = vld [vmem:[%s13 + $0x4] sm:$0xf]
        %v1741 = vld [vmem:[%s15] sm:$0x1]
        %v1743 = vlaneseq
        %v1744 = vshrl.u32 %v1743, 7
        %v1745 = vsub.s32 0, %v1744
        %v1746 = vrot.slane %v1741, %v1745
        %v1750 = vunpack.c.l.b16 %v1739
        %v1751 = vunpack.c.l.b16 %v1740
        %v1752 = vpack.c.b16 %v1751, %v1750
        %v1755 = vsel %vm1573, %v1737, 0
        %v1758 = vsel %vm1573, %v1738, 0
        %1760 = vmatprep.subr.bf16.mxu0 0
        %1761 = vmatpush1.bf16.msra.mxu0 %v1752
        %1762 = vmatprep.subr.bf16.mxu0 0
        %1763 = vmatpush1.bf16.msra.mxu0 0
        %1764 = vmatprep.subr.bf16.mxu0 0
        %1765 = vmatpush1.bf16.msra.mxu0 0
        %1766 = vmatprep.subr.bf16.mxu0 0
        %1767 = vmatpush1.bf16.msra.mxu0 0
        %1768 = vmatprep.subr.bf16.mxu0 0
        %1769 = vmatpush1.bf16.msra.mxu0 0
        %1770 = vmatprep.subr.bf16.mxu0 0
        %1771 = vmatpush1.bf16.msra.mxu0 0
        %1772 = vmatprep.subr.bf16.mxu0 0
        %1773 = vmatpush1.bf16.msra.mxu0 0
        %1774 = vmatprep.subr.bf16.mxu0 0
        %1775 = vmatpush1.bf16.msra.mxu0 0
        %1776 = vmatprep.subr.bf16.mxu0 0
        %1777 = vmatpush1.bf16.msra.mxu0 0
        %1778 = vmatprep.subr.bf16.mxu0 0
        %1779 = vmatpush1.bf16.msra.mxu0 0
        %1780 = vmatprep.subr.bf16.mxu0 0
        %1781 = vmatpush1.bf16.msra.mxu0 0
        %1782 = vmatprep.subr.bf16.mxu0 0
        %1783 = vmatpush1.bf16.msra.mxu0 0
        %1784 = vmatprep.subr.bf16.mxu0 0
        %1785 = vmatpush1.bf16.msra.mxu0 0
        %1786 = vmatprep.subr.bf16.mxu0 0
        %1787 = vmatpush1.bf16.msra.mxu0 0
        %1788 = vmatprep.subr.bf16.mxu0 0
        %1789 = vmatpush1.bf16.msra.mxu0 0
        %1790 = vmatprep.subr.bf16.mxu0 0
        %1791 = vmatpush1.bf16.msra.mxu0 0
        %1792 = vmatprep.mubr.bf16.mxu0 0
        %1793 = vmatmul.mubr.bf16.gmra.mrb[0].mxu0 %v1755
        %v1794 = vpop.f32.mrb[0].mxu0
        %v1795 = vadd.f32 %v1746, %v1794
        %v1796 = vpop.f32.mrb[0].mxu0
        %v1797 = vpop.f32.mrb[0].mxu0
        %v1798 = vadd.f32 %v1746, %v1797
        %v1799 = vpop.f32.mrb[0].mxu0
        %1800 = vmatprep.mubr.bf16.mxu0 0
        %1801 = vmatmul.mubr.bf16.gmra.mrb[0].mxu0 %v1758
        %v1802 = vpop.f32.mrb[0].mxu0
        %v1803 = vadd.f32 %v1746, %v1802
        %v1804 = vpop.f32.mrb[0].mxu0
        %v1805 = vpop.f32.mrb[0].mxu0
        %v1806 = vadd.f32 %v1746, %v1805
        %v1807 = vpop.f32.mrb[0].mxu0
        %1808 = vdwg.mxu0
        %v1809 = vld [vmem:[%s14] sm:$0x1]
        %1811 = vset.pattern.permute.xlu0 32
        %1812 = vperm.xlu0 %1811, %v784
        %v1813 = vpop.permute.xlu0 %1812
        %1816 = vset.pattern.permute.xlu0 32
        %1817 = vperm.xlu0 %1816, %v785
        %v1818 = vpop.permute.xlu0 %1817
        %1821 = vset.pattern.permute.xlu0 32
        %1822 = vperm.xlu0 %1821, %v786
        %v1823 = vpop.permute.xlu0 %1822
        %1826 = vset.pattern.permute.xlu0 32
        %1827 = vperm.xlu0 %1826, %v787
        %v1828 = vpop.permute.xlu0 %1827
        %v1831 = vlaneseq
        %v1832 = vshrl.u32 %v1831, 7
        %v1833 = vsub.s32 0, %v1832
        %v1834 = vrot.slane %v1809, %v1833
        %v1836 = vmul.f32 %v1813, %v1834
        %v1837 = vmul.f32 %v1818, %v1834
        %v1838 = vmul.f32 %v1823, %v1834
        %v1839 = vmul.f32 %v1828, %v1834
        %v1840 = vadd.f32 %v1795, %v1836
        %v1841 = vadd.f32 %v1798, %v1837
        %v1842 = vadd.f32 %v1803, %v1838
        %v1843 = vadd.f32 %v1806, %v1839
        %v1844 = vmax.f32 %v1840, 0.0
        %v1845 = vmax.f32 %v1841, 0.0
        %v1846 = vmax.f32 %v1842, 0.0
        %v1847 = vmax.f32 %v1843, 0.0
        %v1848 = vsub.f32 1.0, %v784
        %v1849 = vsub.f32 1.0, %v785
        %v1850 = vsub.f32 1.0, %v786
        %v1851 = vsub.f32 1.0, %v787
        %1853 = vset.pattern.permute.xlu0 32
        %1854 = vperm.xlu0 %1853, %v1848
        %v1855 = vpop.permute.xlu0 %1854
        %1858 = vset.pattern.permute.xlu0 32
        %1859 = vperm.xlu0 %1858, %v1849
        %v1860 = vpop.permute.xlu0 %1859
        %1863 = vset.pattern.permute.xlu0 32
        %1864 = vperm.xlu0 %1863, %v1850
        %v1865 = vpop.permute.xlu0 %1864
        %1868 = vset.pattern.permute.xlu0 32
        %1869 = vperm.xlu0 %1868, %v1851
        %v1870 = vpop.permute.xlu0 %1869
        %v1872 = vmul.f32 %v1855, %v1834
        %v1873 = vmul.f32 %v1860, %v1834
        %v1874 = vmul.f32 %v1865, %v1834
        %v1875 = vmul.f32 %v1870, %v1834
        %v1876 = vadd.f32 %v1795, %v1872
        %v1877 = vadd.f32 %v1798, %v1873
        %v1878 = vadd.f32 %v1803, %v1874
        %v1879 = vadd.f32 %v1806, %v1875
        %v1880 = vmax.f32 %v1876, 0.0
        %v1881 = vmax.f32 %v1877, 0.0
        %v1882 = vmax.f32 %v1878, 0.0
        %v1883 = vmax.f32 %v1879, 0.0
        %v1884 = vpack.c.bf16 %v1845, %v1844
        %v1885 = vpack.c.bf16 %v1847, %v1846
        %v1886 = vpack.c.bf16 %v1881, %v1880
        %v1887 = vpack.c.bf16 %v1883, %v1882
        %v1888 = vld [vmem:[%s16] sm:$0xf]
        %v1889 = vld [vmem:[%s16 + $0x4] sm:$0xf]
        %v1890 = vld [vmem:[%s16 + $0x8] sm:$0xf]
        %v1891 = vld [vmem:[%s16 + $0xc] sm:$0xf]
        %v1892 = vld [vmem:[%s17] sm:$0x1]
        %v1894 = vlaneseq
        %v1895 = vshrl.u32 %v1894, 7
        %v1896 = vsub.s32 0, %v1895
        %v1897 = vrot.slane %v1892, %v1896
        %v1903 = vunpack.c.l.b16 %v1888
        %v1904 = vunpack.c.l.b16 %v1889
        %v1905 = vunpack.c.l.b16 %v1890
        %v1906 = vunpack.c.l.b16 %v1891
        %v1907 = vpack.c.b16 %v1904, %v1903
        %v1908 = vpack.c.b16 %v1906, %v1905
        %vm1911 = vcmask 261120
        %v1913 = vsel %vm1911, %v1884, 0
        %v1916 = vsel %vm1911, %v1885, 0
        %v1919 = vsel %vm1911, %v1886, 0
        %v1922 = vsel %vm1911, %v1887, 0
        %1924 = vmatprep.subr.bf16.mxu0 0
        %1925 = vmatpush1.bf16.msra.mxu0 %v1907
        %1926 = vmatprep.subr.bf16.mxu0 0
        %1927 = vmatpush1.bf16.msra.mxu0 %v1908
        %1928 = vmatprep.subr.bf16.mxu0 0
        %1929 = vmatpush1.bf16.msra.mxu0 0
        %1930 = vmatprep.subr.bf16.mxu0 0
        %1931 = vmatpush1.bf16.msra.mxu0 0
        %1932 = vmatprep.subr.bf16.mxu0 0
        %1933 = vmatpush1.bf16.msra.mxu0 0
        %1934 = vmatprep.subr.bf16.mxu0 0
        %1935 = vmatpush1.bf16.msra.mxu0 0
        %1936 = vmatprep.subr.bf16.mxu0 0
        %1937 = vmatpush1.bf16.msra.mxu0 0
        %1938 = vmatprep.subr.bf16.mxu0 0
        %1939 = vmatpush1.bf16.msra.mxu0 0
        %1940 = vmatprep.subr.bf16.mxu0 0
        %1941 = vmatpush1.bf16.msra.mxu0 0
        %1942 = vmatprep.subr.bf16.mxu0 0
        %1943 = vmatpush1.bf16.msra.mxu0 0
        %1944 = vmatprep.subr.bf16.mxu0 0
        %1945 = vmatpush1.bf16.msra.mxu0 0
        %1946 = vmatprep.subr.bf16.mxu0 0
        %1947 = vmatpush1.bf16.msra.mxu0 0
        %1948 = vmatprep.subr.bf16.mxu0 0
        %1949 = vmatpush1.bf16.msra.mxu0 0
        %1950 = vmatprep.subr.bf16.mxu0 0
        %1951 = vmatpush1.bf16.msra.mxu0 0
        %1952 = vmatprep.subr.bf16.mxu0 0
        %1953 = vmatpush1.bf16.msra.mxu0 0
        %1954 = vmatprep.subr.bf16.mxu0 0
        %1955 = vmatpush1.bf16.msra.mxu0 0
        %1956 = vmatprep.mubr.bf16.mxu0 0
        %1957 = vmatmul.mubr.bf16.gmra.mrb[0].mxu0 %v1913
        %v1958 = vpop.f32.mrb[0].mxu0
        %v1959 = vadd.f32 %v1897, %v1958
        %v1960 = vpop.f32.mrb[0].mxu0
        %v1961 = vpop.f32.mrb[0].mxu0
        %v1962 = vadd.f32 %v1897, %v1961
        %v1963 = vpop.f32.mrb[0].mxu0
        %1964 = vmatprep.mubr.bf16.mxu0 0
        %1965 = vmatmul.mubr.bf16.gmra.mrb[0].mxu0 %v1916
        %v1966 = vpop.f32.mrb[0].mxu0
        %v1967 = vadd.f32 %v1897, %v1966
        %v1968 = vpop.f32.mrb[0].mxu0
        %v1969 = vpop.f32.mrb[0].mxu0
        %v1970 = vadd.f32 %v1897, %v1969
        %v1971 = vpop.f32.mrb[0].mxu0
        %1972 = vmatprep.mubr.bf16.mxu0 0
        %1973 = vmatmul.mubr.bf16.gmra.mrb[0].mxu0 %v1919
        %v1974 = vpop.f32.mrb[0].mxu0
        %v1975 = vadd.f32 %v1897, %v1974
        %v1976 = vpop.f32.mrb[0].mxu0
        %v1977 = vpop.f32.mrb[0].mxu0
        %v1978 = vadd.f32 %v1897, %v1977
        %v1979 = vpop.f32.mrb[0].mxu0
        %1980 = vmatprep.mubr.bf16.mxu0 0
        %1981 = vmatmul.mubr.bf16.gmra.mrb[0].mxu0 %v1922
        %v1982 = vpop.f32.mrb[0].mxu0
        %v1983 = vadd.f32 %v1897, %v1982
        %v1984 = vpop.f32.mrb[0].mxu0
        %v1985 = vpop.f32.mrb[0].mxu0
        %v1986 = vadd.f32 %v1897, %v1985
        %v1987 = vpop.f32.mrb[0].mxu0
        %1988 = vdwg.mxu0
        %v1989 = vmax.f32 %v1959, 0.0
        %v1990 = vmax.f32 %v1962, 0.0
        %v1991 = vmax.f32 %v1967, 0.0
        %v1992 = vmax.f32 %v1970, 0.0
        %v1993 = vmax.f32 %v1975, 0.0
        %v1994 = vmax.f32 %v1978, 0.0
        %v1995 = vmax.f32 %v1983, 0.0
        %v1996 = vmax.f32 %v1986, 0.0
        %v1997 = vpack.c.bf16 %v1990, %v1989
        %v1998 = vpack.c.bf16 %v1992, %v1991
        %v1999 = vpack.c.bf16 %v1994, %v1993
        %v2000 = vpack.c.bf16 %v1996, %v1995
        %v2001 = vld [vmem:[%s18] sm:$0xf]
        %v2002 = vld [vmem:[%s18 + $0x4] sm:$0xf]
        %v2003 = vld [vmem:[%s18 + $0x8] sm:$0xf]
        %v2004 = vld [vmem:[%s18 + $0xc] sm:$0xf]
        %v2005 = vld [vmem:[%s19] sm:$0x1]
        %v2007 = vlaneseq
        %v2008 = vshrl.u32 %v2007, 7
        %v2009 = vsub.s32 0, %v2008
        %v2010 = vrot.slane %v2005, %v2009
        %v2016 = vunpack.c.l.b16 %v2001
        %v2017 = vunpack.c.l.b16 %v2002
        %v2018 = vunpack.c.l.b16 %v2003
        %v2019 = vunpack.c.l.b16 %v2004
        %v2020 = vpack.c.b16 %v2017, %v2016
        %v2021 = vpack.c.b16 %v2019, %v2018
        %v2025 = vsel %vm1911, %v1997, 0
        %v2028 = vsel %vm1911, %v1998, 0
        %v2031 = vsel %vm1911, %v1999, 0
        %v2034 = vsel %vm1911, %v2000, 0
        %2036 = vmatprep.subr.bf16.mxu0 0
        %2037 = vmatpush1.bf16.msra.mxu0 %v2020
        %2038 = vmatprep.subr.bf16.mxu0 0
        %2039 = vmatpush1.bf16.msra.mxu0 %v2021
        %2040 = vmatprep.subr.bf16.mxu0 0
        %2041 = vmatpush1.bf16.msra.mxu0 0
        %2042 = vmatprep.subr.bf16.mxu0 0
        %2043 = vmatpush1.bf16.msra.mxu0 0
        %2044 = vmatprep.subr.bf16.mxu0 0
        %2045 = vmatpush1.bf16.msra.mxu0 0
        %2046 = vmatprep.subr.bf16.mxu0 0
        %2047 = vmatpush1.bf16.msra.mxu0 0
        %2048 = vmatprep.subr.bf16.mxu0 0
        %2049 = vmatpush1.bf16.msra.mxu0 0
        %2050 = vmatprep.subr.bf16.mxu0 0
        %2051 = vmatpush1.bf16.msra.mxu0 0
        %2052 = vmatprep.subr.bf16.mxu0 0
        %2053 = vmatpush1.bf16.msra.mxu0 0
        %2054 = vmatprep.subr.bf16.mxu0 0
        %2055 = vmatpush1.bf16.msra.mxu0 0
        %2056 = vmatprep.subr.bf16.mxu0 0
        %2057 = vmatpush1.bf16.msra.mxu0 0
        %2058 = vmatprep.subr.bf16.mxu0 0
        %2059 = vmatpush1.bf16.msra.mxu0 0
        %2060 = vmatprep.subr.bf16.mxu0 0
        %2061 = vmatpush1.bf16.msra.mxu0 0
        %2062 = vmatprep.subr.bf16.mxu0 0
        %2063 = vmatpush1.bf16.msra.mxu0 0
        %2064 = vmatprep.subr.bf16.mxu0 0
        %2065 = vmatpush1.bf16.msra.mxu0 0
        %2066 = vmatprep.subr.bf16.mxu0 0
        %2067 = vmatpush1.bf16.msra.mxu0 0
        %2068 = vmatprep.mubr.bf16.mxu0 0
        %2069 = vmatmul.mubr.bf16.gmra.mrb[0].mxu0 %v2025
        %v2070 = vpop.f32.mrb[0].mxu0
        %v2071 = vadd.f32 %v2010, %v2070
        %v2072 = vpop.f32.mrb[0].mxu0
        %v2073 = vpop.f32.mrb[0].mxu0
        %v2074 = vadd.f32 %v2010, %v2073
        %v2075 = vpop.f32.mrb[0].mxu0
        %2076 = vmatprep.mubr.bf16.mxu0 0
        %2077 = vmatmul.mubr.bf16.gmra.mrb[0].mxu0 %v2028
        %v2078 = vpop.f32.mrb[0].mxu0
        %v2079 = vadd.f32 %v2010, %v2078
        %v2080 = vpop.f32.mrb[0].mxu0
        %v2081 = vpop.f32.mrb[0].mxu0
        %v2082 = vadd.f32 %v2010, %v2081
        %v2083 = vpop.f32.mrb[0].mxu0
        %2084 = vmatprep.mubr.bf16.mxu0 0
        %2085 = vmatmul.mubr.bf16.gmra.mrb[0].mxu0 %v2031
        %v2086 = vpop.f32.mrb[0].mxu0
        %v2087 = vadd.f32 %v2010, %v2086
        %v2088 = vpop.f32.mrb[0].mxu0
        %v2089 = vpop.f32.mrb[0].mxu0
        %v2090 = vadd.f32 %v2010, %v2089
        %v2091 = vpop.f32.mrb[0].mxu0
        %2092 = vmatprep.mubr.bf16.mxu0 0
        %2093 = vmatmul.mubr.bf16.gmra.mrb[0].mxu0 %v2034
        %v2094 = vpop.f32.mrb[0].mxu0
        %v2095 = vadd.f32 %v2010, %v2094
        %v2096 = vpop.f32.mrb[0].mxu0
        %v2097 = vpop.f32.mrb[0].mxu0
        %v2098 = vadd.f32 %v2010, %v2097
        %v2099 = vpop.f32.mrb[0].mxu0
        %2100 = vdwg.mxu0
        %v2101 = vmax.f32 %v2071, 0.0
        %v2102 = vmax.f32 %v2074, 0.0
        %v2103 = vmax.f32 %v2079, 0.0
        %v2104 = vmax.f32 %v2082, 0.0
        %v2105 = vmax.f32 %v2087, 0.0
        %v2106 = vmax.f32 %v2090, 0.0
        %v2107 = vmax.f32 %v2095, 0.0
        %v2108 = vmax.f32 %v2098, 0.0
        %v2109 = vpack.c.bf16 %v2102, %v2101
        %v2110 = vpack.c.bf16 %v2104, %v2103
        %v2111 = vpack.c.bf16 %v2106, %v2105
        %v2112 = vpack.c.bf16 %v2108, %v2107
        %v2113 = vld [vmem:[%s20] sm:$0xf]
        %v2114 = vld [vmem:[%s20 + $0x4] sm:$0xf]
        %v2115 = vld [vmem:[%s21] sm:$0x1]
        %v2117 = vlaneseq
        %v2118 = vshrl.u32 %v2117, 7
        %v2119 = vsub.s32 0, %v2118
        %v2120 = vrot.slane %v2115, %v2119
        %v2124 = vunpack.c.l.b16 %v2113
        %v2125 = vunpack.c.l.b16 %v2114
        %v2126 = vpack.c.b16 %v2125, %v2124
        %v2129 = vsel %vm1573, %v2109, 0
        %v2132 = vsel %vm1573, %v2110, 0
        %v2135 = vsel %vm1573, %v2111, 0
        %v2138 = vsel %vm1573, %v2112, 0
        %2140 = vmatprep.subr.bf16.mxu0 0
        %2141 = vmatpush1.bf16.msra.mxu0 %v2126
        %2142 = vmatprep.subr.bf16.mxu0 0
        %2143 = vmatpush1.bf16.msra.mxu0 0
        %2144 = vmatprep.subr.bf16.mxu0 0
        %2145 = vmatpush1.bf16.msra.mxu0 0
        %2146 = vmatprep.subr.bf16.mxu0 0
        %2147 = vmatpush1.bf16.msra.mxu0 0
        %2148 = vmatprep.subr.bf16.mxu0 0
        %2149 = vmatpush1.bf16.msra.mxu0 0
        %2150 = vmatprep.subr.bf16.mxu0 0
        %2151 = vmatpush1.bf16.msra.mxu0 0
        %2152 = vmatprep.subr.bf16.mxu0 0
        %2153 = vmatpush1.bf16.msra.mxu0 0
        %2154 = vmatprep.subr.bf16.mxu0 0
        %2155 = vmatpush1.bf16.msra.mxu0 0
        %2156 = vmatprep.subr.bf16.mxu0 0
        %2157 = vmatpush1.bf16.msra.mxu0 0
        %2158 = vmatprep.subr.bf16.mxu0 0
        %2159 = vmatpush1.bf16.msra.mxu0 0
        %2160 = vmatprep.subr.bf16.mxu0 0
        %2161 = vmatpush1.bf16.msra.mxu0 0
        %2162 = vmatprep.subr.bf16.mxu0 0
        %2163 = vmatpush1.bf16.msra.mxu0 0
        %2164 = vmatprep.subr.bf16.mxu0 0
        %2165 = vmatpush1.bf16.msra.mxu0 0
        %2166 = vmatprep.subr.bf16.mxu0 0
        %2167 = vmatpush1.bf16.msra.mxu0 0
        %2168 = vmatprep.subr.bf16.mxu0 0
        %2169 = vmatpush1.bf16.msra.mxu0 0
        %2170 = vmatprep.subr.bf16.mxu0 0
        %2171 = vmatpush1.bf16.msra.mxu0 0
        %2172 = vmatprep.mubr.bf16.mxu0 0
        %2173 = vmatmul.mubr.bf16.gmra.mrb[0].mxu0 %v2129
        %v2174 = vpop.f32.mrb[0].mxu0
        %v2175 = vadd.f32 %v2120, %v2174
        %v2176 = vpop.f32.mrb[0].mxu0
        %v2177 = vpop.f32.mrb[0].mxu0
        %v2178 = vadd.f32 %v2120, %v2177
        %v2179 = vpop.f32.mrb[0].mxu0
        %2180 = vmatprep.mubr.bf16.mxu0 0
        %2181 = vmatmul.mubr.bf16.gmra.mrb[0].mxu0 %v2132
        %v2182 = vpop.f32.mrb[0].mxu0
        %v2183 = vadd.f32 %v2120, %v2182
        %v2184 = vpop.f32.mrb[0].mxu0
        %v2185 = vpop.f32.mrb[0].mxu0
        %v2186 = vadd.f32 %v2120, %v2185
        %v2187 = vpop.f32.mrb[0].mxu0
        %2188 = vmatprep.mubr.bf16.mxu0 0
        %2189 = vmatmul.mubr.bf16.gmra.mrb[0].mxu0 %v2135
        %v2190 = vpop.f32.mrb[0].mxu0
        %v2191 = vadd.f32 %v2120, %v2190
        %v2192 = vpop.f32.mrb[0].mxu0
        %v2193 = vpop.f32.mrb[0].mxu0
        %v2194 = vadd.f32 %v2120, %v2193
        %v2195 = vpop.f32.mrb[0].mxu0
        %2196 = vmatprep.mubr.bf16.mxu0 0
        %2197 = vmatmul.mubr.bf16.gmra.mrb[0].mxu0 %v2138
        %v2198 = vpop.f32.mrb[0].mxu0
        %v2199 = vadd.f32 %v2120, %v2198
        %v2200 = vpop.f32.mrb[0].mxu0
        %v2201 = vpop.f32.mrb[0].mxu0
        %v2202 = vadd.f32 %v2120, %v2201
        %v2203 = vpop.f32.mrb[0].mxu0
        %2204 = vdwg.mxu0
        %v2205 = vmax.f32 %v2175, 0.0
        %v2206 = vmax.f32 %v2178, 0.0
        %v2207 = vmax.f32 %v2183, 0.0
        %v2208 = vmax.f32 %v2186, 0.0
        %v2209 = vmax.f32 %v2191, 0.0
        %v2210 = vmax.f32 %v2194, 0.0
        %v2211 = vmax.f32 %v2199, 0.0
        %v2212 = vmax.f32 %v2202, 0.0
        %v2213 = vpack.c.bf16 %v2206, %v2205
        %v2214 = vpack.c.bf16 %v2208, %v2207
        %v2215 = vpack.c.bf16 %v2210, %v2209
        %v2216 = vpack.c.bf16 %v2212, %v2211
        %v2217 = vld [vmem:[%s22] sm:$0xf]
        %v2218 = vld [vmem:[#allocation2] sm:$0x1]
        %v2220 = vlaneseq
        %v2221 = vshrl.u32 %v2220, 7
        %v2222 = vsub.s32 0, %v2221
        %v2223 = vrot.slane %v2218, %v2222
        %vm2225 = vcmask 64512
        %v2227 = vsel %vm2225, %v2213, 0
        %v2230 = vsel %vm2225, %v2214, 0
        %v2233 = vsel %vm2225, %v2215, 0
        %v2236 = vsel %vm2225, %v2216, 0
        %vm2238 = vcmask 1043456
        %v2240 = vsel %vm2238, %v2217, 0
        %2242 = vmatprep.subr.bf16.mxu0 0
        %2243 = vmatpush1.bf16.msra.mxu0 %v2240
        %2244 = vmatprep.subr.bf16.mxu0 0
        %2245 = vmatpush1.bf16.msra.mxu0 0
        %2246 = vmatprep.subr.bf16.mxu0 0
        %2247 = vmatpush1.bf16.msra.mxu0 0
        %2248 = vmatprep.subr.bf16.mxu0 0
        %2249 = vmatpush1.bf16.msra.mxu0 0
        %2250 = vmatprep.subr.bf16.mxu0 0
        %2251 = vmatpush1.bf16.msra.mxu0 0
        %2252 = vmatprep.subr.bf16.mxu0 0
        %2253 = vmatpush1.bf16.msra.mxu0 0
        %2254 = vmatprep.subr.bf16.mxu0 0
        %2255 = vmatpush1.bf16.msra.mxu0 0
        %2256 = vmatprep.subr.bf16.mxu0 0
        %2257 = vmatpush1.bf16.msra.mxu0 0
        %2258 = vmatprep.subr.bf16.mxu0 0
        %2259 = vmatpush1.bf16.msra.mxu0 0
        %2260 = vmatprep.subr.bf16.mxu0 0
        %2261 = vmatpush1.bf16.msra.mxu0 0
        %2262 = vmatprep.subr.bf16.mxu0 0
        %2263 = vmatpush1.bf16.msra.mxu0 0
        %2264 = vmatprep.subr.bf16.mxu0 0
        %2265 = vmatpush1.bf16.msra.mxu0 0
        %2266 = vmatprep.subr.bf16.mxu0 0
        %2267 = vmatpush1.bf16.msra.mxu0 0
        %2268 = vmatprep.subr.bf16.mxu0 0
        %2269 = vmatpush1.bf16.msra.mxu0 0
        %2270 = vmatprep.subr.bf16.mxu0 0
        %2271 = vmatpush1.bf16.msra.mxu0 0
        %2272 = vmatprep.subr.bf16.mxu0 0
        %2273 = vmatpush1.bf16.msra.mxu0 0
        %2274 = vmatprep.mubr.bf16.mxu0 0
        %2275 = vmatmul.mubr.bf16.gmra.mrb[0].mxu0 %v2227
        %v2276 = vpop.f32.mrb[0].mxu0
        %v2277 = vadd.f32 %v2223, %v2276
        %v2278 = vpop.f32.mrb[0].mxu0
        %v2279 = vpop.f32.mrb[0].mxu0
        %v2280 = vadd.f32 %v2223, %v2279
        %v2281 = vpop.f32.mrb[0].mxu0
        %2282 = vmatprep.mubr.bf16.mxu0 0
        %2283 = vmatmul.mubr.bf16.gmra.mrb[0].mxu0 %v2230
        %v2284 = vpop.f32.mrb[0].mxu0
        %v2285 = vadd.f32 %v2223, %v2284
        %v2286 = vpop.f32.mrb[0].mxu0
        %v2287 = vpop.f32.mrb[0].mxu0
        %v2288 = vadd.f32 %v2223, %v2287
        %v2289 = vpop.f32.mrb[0].mxu0
        %2290 = vmatprep.mubr.bf16.mxu0 0
        %2291 = vmatmul.mubr.bf16.gmra.mrb[0].mxu0 %v2233
        %v2292 = vpop.f32.mrb[0].mxu0
        %v2293 = vadd.f32 %v2223, %v2292
        %v2294 = vpop.f32.mrb[0].mxu0
        %v2295 = vpop.f32.mrb[0].mxu0
        %v2296 = vadd.f32 %v2223, %v2295
        %v2297 = vpop.f32.mrb[0].mxu0
        %2298 = vmatprep.mubr.bf16.mxu0 0
        %2299 = vmatmul.mubr.bf16.gmra.mrb[0].mxu0 %v2236
        %v2300 = vpop.f32.mrb[0].mxu0
        %v2301 = vadd.f32 %v2223, %v2300
        %v2302 = vpop.f32.mrb[0].mxu0
        %v2303 = vpop.f32.mrb[0].mxu0
        %v2304 = vadd.f32 %v2223, %v2303
        %v2305 = vpop.f32.mrb[0].mxu0
        %2306 = vdwg.mxu0
        %v2307 = vxor.u32 %v2277, 2147483648
        %v2308 = vxor.u32 %v2280, 2147483648
        %v2309 = vxor.u32 %v2285, 2147483648
        %v2310 = vxor.u32 %v2288, 2147483648
        %v2311 = vmul.f32 %v2307, 1.442695
        %v2312 = vpow.pop %v2311
        %v2313 = vmul.f32 %v2308, 1.442695
        %v2314 = vpow.pop %v2313
        %v2315 = vmul.f32 %v2309, 1.442695
        %v2316 = vpow.pop %v2315
        %v2317 = vmul.f32 %v2310, 1.442695
        %v2318 = vpow.pop %v2317
        %v2319 = vadd.f32 %v2312, 1.0
        %v2320 = vadd.f32 %v2314, 1.0
        %v2321 = vadd.f32 %v2316, 1.0
        %v2322 = vadd.f32 %v2318, 1.0
        %v2323 = vrcp.pop %v2319
        %v2324 = vmul.f32 1.0, %v2323
        %v2325 = vrcp.pop %v2320
        %v2326 = vmul.f32 1.0, %v2325
        %v2327 = vrcp.pop %v2321
        %v2328 = vmul.f32 1.0, %v2327
        %v2329 = vrcp.pop %v2322
        %v2330 = vmul.f32 1.0, %v2329
        %v2331 = vxor.u32 %v2293, 2147483648
        %v2332 = vxor.u32 %v2296, 2147483648
        %v2333 = vxor.u32 %v2301, 2147483648
        %v2334 = vxor.u32 %v2304, 2147483648
        %v2335 = vmul.f32 %v2331, 1.442695
        %v2336 = vpow.pop %v2335
        %v2337 = vmul.f32 %v2332, 1.442695
        %v2338 = vpow.pop %v2337
        %v2339 = vmul.f32 %v2333, 1.442695
        %v2340 = vpow.pop %v2339
        %v2341 = vmul.f32 %v2334, 1.442695
        %v2342 = vpow.pop %v2341
        %v2343 = vadd.f32 %v2336, 1.0
        %v2344 = vadd.f32 %v2338, 1.0
        %v2345 = vadd.f32 %v2340, 1.0
        %v2346 = vadd.f32 %v2342, 1.0
        %v2347 = vrcp.pop %v2343
        %v2348 = vmul.f32 1.0, %v2347
        %v2349 = vrcp.pop %v2344
        %v2350 = vmul.f32 1.0, %v2349
        %v2351 = vrcp.pop %v2345
        %v2352 = vmul.f32 1.0, %v2351
        %v2353 = vrcp.pop %v2346
        %v2354 = vmul.f32 1.0, %v2353
        %2359 = vrot.lane.b32.xlu0 %v2348, 32
        %v2360 = vpop.permute.xlu0 %2359
        %2361 = vrot.lane.b32.xlu0 %v2350, 32
        %v2362 = vpop.permute.xlu0 %2361
        %2363 = vrot.lane.b32.xlu0 %v2352, 32
        %v2364 = vpop.permute.xlu0 %2363
        %2365 = vrot.lane.b32.xlu0 %v2354, 32
        %v2366 = vpop.permute.xlu0 %2365
        %v2371 = vmul.f32 %v784, %v2360
        %v2372 = vmul.f32 %v785, %v2362
        %v2373 = vmul.f32 %v786, %v2364
        %v2374 = vmul.f32 %v787, %v2366
        %2379 = vrot.lane.b32.xlu0 %v2324, 32
        %v2380 = vpop.permute.xlu0 %2379
        %2381 = vrot.lane.b32.xlu0 %v2326, 32
        %v2382 = vpop.permute.xlu0 %2381
        %2383 = vrot.lane.b32.xlu0 %v2328, 32
        %v2384 = vpop.permute.xlu0 %2383
        %2385 = vrot.lane.b32.xlu0 %v2330, 32
        %v2386 = vpop.permute.xlu0 %2385
        %v2391 = vmul.f32 %v1848, %v2380
        %v2392 = vmul.f32 %v1849, %v2382
        %v2393 = vmul.f32 %v1850, %v2384
        %v2394 = vmul.f32 %v1851, %v2386
        %v2395 = vadd.f32 %v2371, %v2391
        %v2396 = vadd.f32 %v2372, %v2392
        %v2397 = vadd.f32 %v2373, %v2393
        %v2398 = vadd.f32 %v2374, %v2394
        %v2399 = vmul.f32 %v784, %v2380
        %v2400 = vmul.f32 %v785, %v2382
        %v2401 = vmul.f32 %v786, %v2384
        %v2402 = vmul.f32 %v787, %v2386
        %v2403 = vmul.f32 %v1848, %v2360
        %v2404 = vmul.f32 %v1849, %v2362
        %v2405 = vmul.f32 %v1850, %v2364
        %v2406 = vmul.f32 %v1851, %v2366
        %v2407 = vadd.f32 %v2399, %v2403
        %v2408 = vadd.f32 %v2400, %v2404
        %v2409 = vadd.f32 %v2401, %v2405
        %v2410 = vadd.f32 %v2402, %v2406
        %v2411 = vsub.f32 %v2407, %v2395
        %v2412 = vsub.f32 %v2408, %v2396
        %v2413 = vsub.f32 %v2409, %v2397
        %v2414 = vsub.f32 %v2410, %v2398
        %2419 = vrot.lane.b32.xlu0 %v2411, 97
        %v2420 = vpop.permute.xlu0 %2419
        %2421 = vrot.lane.b32.xlu0 %v2412, 97
        %v2422 = vpop.permute.xlu0 %2421
        %2423 = vrot.lane.b32.xlu0 %v2413, 97
        %v2424 = vpop.permute.xlu0 %2423
        %2425 = vrot.lane.b32.xlu0 %v2414, 97
        %v2426 = vpop.permute.xlu0 %2425
        %vm2431 = vcmask 7168
        %v2432 = vsel %vm2431, %v2277, %v2420
        %v2433 = vsel %vm2431, %v2280, %v2422
        %v2434 = vsel %vm2431, %v2285, %v2424
        %v2435 = vsel %vm2431, %v2288, %v2426
        %vm2436 = vcmask 15360
        %2437 = vst.msk [vmem:[%s781] sm:$0xff] %vm2436, %v2432
        %2438 = vst.msk [vmem:[%s781 + $0x8] sm:$0xff] %vm2436, %v2433
        %2439 = vst.msk [vmem:[%s781 + $0x10] sm:$0xff] %vm2436, %v2434
        %2440 = vst.msk [vmem:[%s781 + $0x18] sm:$0xff] %vm2436, %v2435
        %s2441 = smul.u32 4, %s39
        %p2442 = scmp.lt.s32.totalorder %s2441, 7
        %s2443 = scalar_select %p2442, %s2441, 7
        %s2444 = smul.addr %s2443, 8
        %s2445 = scalar_lea.vmem %s24, %s2444
        // Predicated region
        $region129: #{tpu_custom_call.1} parent=115 // pred_check
          %p2446 = pneg %p566
        $region130: #{tpu_custom_call.1} parent=115 // pred_check_branch
          %2448 = sbr.rel (%p2446) target = $region132
        $region131: #{tpu_custom_call.1} parent=115 // pred_region
          %s2449 = smul.u32 4, %s39
        $region132: #{tpu_custom_call.1} parent=115 // pred_fallthru
          _
      $region116: #{tpu_custom_call.1} parent=5 // pred_fallthru
        _
      %p2450 = scmp.le.s32.totalorder 2, %s34
      // Predicated region
      $region133: #{tpu_custom_call.1} parent=5 // pred_check
        %p2451 = pneg %p2450
      $region134: #{tpu_custom_call.1} parent=5 // pred_check_branch
        %2453 = sbr.rel (%p2451) target = $region136
      $region135: #{tpu_custom_call.1} parent=5 // pred_region
        %s2454 = ssub.s32 %s34, 2
        // Predicated region
        $region137: #{tpu_custom_call.1} parent=135 // pred_check
          %p2455 = pneg %p572
        $region138: #{tpu_custom_call.1} parent=135 // pred_check_branch
          %2457 = sbr.rel (%p2455) target = $region140
        $region139: #{tpu_custom_call.1} parent=135 // pred_region
          %s2458 = smul.u32 4, %s40
          %p2459 = scmp.lt.s32.totalorder %s2458, 7
          %s2460 = scalar_select %p2459, %s2458, 7
          %s2461 = smul.addr %s2460, 8
          %s2462 = scalar_lea.vmem %s24, %s2461
        $region140: #{tpu_custom_call.1} parent=135 // pred_fallthru
          _
      $region136: #{tpu_custom_call.1} parent=5 // pred_fallthru
        _
    $region6: #{tpu_custom_call.1} parent=1 // loop_footer
      %s38 = sadd.s32 1, %s34
    $region7: #{tpu_custom_call.1} parent=1 // loop_footer_branch
      %33 = sbr.rel target = $region3
    $region8: #{tpu_custom_call.1} parent=1 // loop_exit
      _
    %2463 = vsyncpa [#allocation4], 1
    %s2464 = scalar_lea.sflag [#allocation4], 1
    %2465 = vsyncpa %s2464, 1
    %2466 = vsyncpa [#allocation6], 1

</llo_original>
